<compile_context>
chip_gen: v7x
topology: tpu7x:2x2x1
jax: 0.10.0
libtpu: 0.0.40
codegen_flags: <defaults>
</compile_context>

<pallas_src>
import math

import jax
import jax.numpy as jnp
from jax.experimental import pallas as pl
from jax.experimental.pallas import tpu as pltpu

EPS = 1e-5
NUM_HEADS = 16  # nn.MultiheadAttention(embedding_size, 16)


# ----------------------------------------------------------------------------
# In-kernel LayerNorm over the last two dims (P, E) per batch element.
# Two chained single-axis means (equal group sizes => exact overall mean).
# ----------------------------------------------------------------------------
def _layernorm_2d(x, w, b):
    mean = jnp.mean(jnp.mean(x, axis=2, keepdims=True), axis=1, keepdims=True)
    d = x - mean
    var = jnp.mean(jnp.mean(d * d, axis=2, keepdims=True), axis=1, keepdims=True)
    return d * jax.lax.rsqrt(var + EPS) * w + b


# ----------------------------------------------------------------------------
# Fully fused encoder kernel (single grid step, everything VMEM-resident).
# ----------------------------------------------------------------------------
def _make_encoder_kernel(B, P, E):
    L = B  # attention sequence axis = dim0 (batch_first=False semantics)

    def kernel(x_ref, ln1w_ref, ln1b_ref, wqkv_ref, bqkv_ref, seg_ref,
               wo_ref, bo_ref, ln2w_ref, ln2b_ref,
               w1_ref, b1_ref, w2_ref, b2_ref, o_ref):
        x = x_ref[...]                                         # (B, P, E) f32

        # ---- LayerNorm1 + folded q/k/v + attn in_proj (one bf16 MXU matmul,
        #      B collapsed into the sublane axis: (B*P, E) @ (E, 3E)) --------
        xn = _layernorm_2d(x, ln1w_ref[...], ln1b_ref[...])
        qkv = (jnp.dot(xn.reshape(B * P, E).astype(jnp.bfloat16), wqkv_ref[...],
                       preferred_element_type=jnp.float32)
               + bqkv_ref[...]).reshape(B, P, 3 * E)
        q = qkv[:, :, :E]
        k = qkv[:, :, E:2 * E]
        v = qkv[:, :, 2 * E:]

        # ---- Attention core: zero head-split/merge transposes --------------
        # Scores for all (l, m) pairs via one lane-dense (L*L*P, E) @ (E, E)
        # matmul against the block-diagonal per-head segment-sum matrix
        # (scale 1/sqrt(Dh) folded in).  Each lane of `s` holds its head's
        # score, already broadcast across that head's Dh lanes.
        prod = (q[:, None, :, :] * k[None, :, :, :]).reshape(L * L * P, E)
        s = jnp.dot(prod, seg_ref[...],
                    preferred_element_type=jnp.float32).reshape(L, L, P, E)
        mx = jnp.max(s, axis=1, keepdims=True)                 # softmax over m
        p = jnp.exp(s - mx)
        den = jnp.sum(p, axis=1, keepdims=True)
        wgt = p * pl.reciprocal(den, approx=True)              # EUP, off VALU
        attn = jnp.sum(wgt * v[None, :, :, :], axis=1)         # (B, P, E)

        # ---- attention out-proj + residual ---------------------------------
        x1 = (jnp.dot(attn.reshape(B * P, E).astype(jnp.bfloat16), wo_ref[...],
                      preferred_element_type=jnp.float32)
              + bo_ref[...] + x.reshape(B * P, E)).reshape(B, P, E)

        # ---- LayerNorm2 + MLP + residual ------------------------------------
        # TODO(synk): MLP class is not defined in the provided source; canonical
        # ViT MLP assumed (LN -> Linear(E,4E) -> GELU(tanh approx) -> Linear(4E,E)).
        xn2 = _layernorm_2d(x1, ln2w_ref[...], ln2b_ref[...])
        h = (jnp.dot(xn2.reshape(B * P, E).astype(jnp.bfloat16), w1_ref[...],
                     preferred_element_type=jnp.float32) + b1_ref[...])
        h = jax.nn.gelu(h, approximate=True)
        y = (jnp.dot(h.astype(jnp.bfloat16), w2_ref[...],
                     preferred_element_type=jnp.float32) + b2_ref[...])
        o_ref[...] = y.reshape(B, P, E) + x1

    return kernel


# ----------------------------------------------------------------------------
# Parameter preparation (once, outside the hot path): fold q/k/v Linear + MHA
# in_proj into one (E, 3E) weight, pre-transpose to right-multiply layout,
# cast matmul weights to bf16, build the per-head segment-sum matrix.
# ----------------------------------------------------------------------------
def prepare_params(params, num_heads=NUM_HEADS):
    E = params["q_w"].shape[0]
    Dh = E // num_heads
    iw, ib = params["attn_in_w"], params["attn_in_b"]

    def fold(w, b, wi, bi):
        # y2 = (x @ w^T + b) @ wi^T + bi  ==  x @ (w^T wi^T) + (wi b + bi)
        return w.T @ wi.T, wi @ b + bi

    wq, bq = fold(params["q_w"], params["q_b"], iw[:E], ib[:E])
    wk, bk = fold(params["k_w"], params["k_b"], iw[E:2 * E], ib[E:2 * E])
    wv, bv = fold(params["v_w"], params["v_b"], iw[2 * E:], ib[2 * E:])

    head_id = jnp.arange(E) // Dh
    seg = (head_id[:, None] == head_id[None, :]).astype(jnp.float32) / math.sqrt(Dh)

    return dict(
        ln1_w=params["ln1_w"], ln1_b=params["ln1_b"],
        w_qkv=jnp.concatenate([wq, wk, wv], axis=1).astype(jnp.bfloat16),
        b_qkv=jnp.concatenate([bq, bk, bv]).reshape(1, 3 * E),
        seg=seg,
        w_out=params["attn_out_w"].T.astype(jnp.bfloat16),
        b_out=params["attn_out_b"].reshape(1, E),
        ln2_w=params["ln2_w"], ln2_b=params["ln2_b"],
        w_fc1=params["fc1_w"].T.astype(jnp.bfloat16),
        b_fc1=params["fc1_b"].reshape(1, -1),
        w_fc2=params["fc2_w"].T.astype(jnp.bfloat16),
        b_fc2=params["fc2_b"].reshape(1, -1),
    )


# ----------------------------------------------------------------------------
# Full Encoder forward (matches the PyTorch module's forward()): ONE pallas_call.
# ----------------------------------------------------------------------------
def encoder_forward(x, prep, last_layer=False):
    B, P, E = x.shape
    Hd = prep["w_fc1"].shape[1]
    L = B

    flops = 2 * B * P * E * (3 * E + E + 2 * Hd) + 2 * (L * L * P) * E * E
    transcendentals = L * L * P * E + B * P * Hd
    bytes_accessed = (sum(int(v.size) * v.dtype.itemsize for v in prep.values())
                      + 2 * int(x.size) * 4)

    out = pl.pallas_call(
        _make_encoder_kernel(B, P, E),
        out_shape=jax.ShapeDtypeStruct((B, P, E), jnp.float32),
        grid=(1,),
        in_specs=[
            pl.BlockSpec((B, P, E), lambda i: (0, 0, 0)),      # x
            pl.BlockSpec((P, E), lambda i: (0, 0)),            # ln1 weight
            pl.BlockSpec((P, E), lambda i: (0, 0)),            # ln1 bias
            pl.BlockSpec((E, 3 * E), lambda i: (0, 0)),        # folded W_qkv (bf16)
            pl.BlockSpec((1, 3 * E), lambda i: (0, 0)),        # folded b_qkv
            pl.BlockSpec((E, E), lambda i: (0, 0)),            # per-head seg matrix
            pl.BlockSpec((E, E), lambda i: (0, 0)),            # W_out^T (bf16)
            pl.BlockSpec((1, E), lambda i: (0, 0)),            # b_out
            pl.BlockSpec((P, E), lambda i: (0, 0)),            # ln2 weight
            pl.BlockSpec((P, E), lambda i: (0, 0)),            # ln2 bias
            pl.BlockSpec((E, Hd), lambda i: (0, 0)),           # W_fc1^T (bf16)
            pl.BlockSpec((1, Hd), lambda i: (0, 0)),           # b_fc1
            pl.BlockSpec((Hd, E), lambda i: (0, 0)),           # W_fc2^T (bf16)
            pl.BlockSpec((1, E), lambda i: (0, 0)),            # b_fc2
        ],
        out_specs=pl.BlockSpec((B, P, E), lambda i: (0, 0, 0)),
        # Attention reduces over the B axis (batch_first=False), so the single
        # grid step must NOT be declared parallel over B.
        compiler_params=pltpu.CompilerParams(dimension_semantics=("arbitrary",)),
        cost_estimate=pl.CostEstimate(flops=flops,
                                      transcendentals=transcendentals,
                                      bytes_accessed=bytes_accessed),
    )(x, prep["ln1_w"], prep["ln1_b"], prep["w_qkv"], prep["b_qkv"], prep["seg"],
      prep["w_out"], prep["b_out"], prep["ln2_w"], prep["ln2_b"],
      prep["w_fc1"], prep["b_fc1"], prep["w_fc2"], prep["b_fc2"])

    if last_layer:
        return out[:, 0, :]
    return out


# ----------------------------------------------------------------------------
# Pure-JAX reference (unfused, f32, PyTorch layouts) for parity checking.
# ----------------------------------------------------------------------------
def encoder_reference(x, params, last_layer=False):
    B, P, E = x.shape
    H = NUM_HEADS
    Dh = E // H

    def ln(t, w, b):
        mean = jnp.mean(t, axis=(1, 2), keepdims=True)
        var = jnp.mean((t - mean) ** 2, axis=(1, 2), keepdims=True)
        return (t - mean) * jax.lax.rsqrt(var + EPS) * w + b

    x1 = ln(x, params["ln1_w"], params["ln1_b"])
    q = x1 @ params["q_w"].T + params["q_b"]
    k = x1 @ params["k_w"].T + params["k_b"]
    v = x1 @ params["v_w"].T + params["v_b"]
    iw, ib = params["attn_in_w"], params["attn_in_b"]
    q2 = q @ iw[:E].T + ib[:E]
    k2 = k @ iw[E:2 * E].T + ib[E:2 * E]
    v2 = v @ iw[2 * E:].T + ib[2 * E:]

    def heads(t):  # (L, N, E) -> (N*H, L, Dh)
        return t.reshape(B, P, H, Dh).transpose(1, 2, 0, 3).reshape(P * H, B, Dh)

    qh, kh, vh = heads(q2), heads(k2), heads(v2)
    s = jnp.einsum("bld,bmd->blm", qh, kh) / math.sqrt(Dh)
    p = jax.nn.softmax(s, axis=-1)
    o = jnp.einsum("blm,bmd->bld", p, vh)
    attn = o.reshape(P, H, B, Dh).transpose(2, 0, 1, 3).reshape(B, P, E)
    attn = attn @ params["attn_out_w"].T + params["attn_out_b"]
    x1r = attn + x

    m = ln(x1r, params["ln2_w"], params["ln2_b"])
    h = jax.nn.gelu(m @ params["fc1_w"].T + params["fc1_b"], approximate=True)
    x2 = h @ params["fc2_w"].T + params["fc2_b"]
    out = x2 + x1r
    return out[:, 0, :] if last_layer else out


# ----------------------------------------------------------------------------
# Deterministic parameter init (shapes per Encoder.__init__)
# ----------------------------------------------------------------------------
def init_params(key, P, E, hidden):
    ks = jax.random.split(key, 14)

    def nrm(k, shape):
        return jax.random.normal(k, shape, jnp.float32) * 0.02

    return dict(
        ln1_w=jnp.ones((P, E), jnp.float32),
        ln1_b=jnp.zeros((P, E), jnp.float32),
        q_w=nrm(ks[0], (E, E)), q_b=nrm(ks[1], (E,)),
        k_w=nrm(ks[2], (E, E)), k_b=nrm(ks[3], (E,)),
        v_w=nrm(ks[4], (E, E)), v_b=nrm(ks[5], (E,)),
        attn_in_w=nrm(ks[6], (3 * E, E)), attn_in_b=nrm(ks[7], (3 * E,)),
        attn_out_w=nrm(ks[8], (E, E)), attn_out_b=nrm(ks[9], (E,)),
        ln2_w=jnp.ones((P, E), jnp.float32),
        ln2_b=jnp.zeros((P, E), jnp.float32),
        fc1_w=nrm(ks[10], (hidden, E)), fc1_b=nrm(ks[11], (hidden,)),
        fc2_w=nrm(ks[12], (E, hidden)), fc2_b=nrm(ks[13], (E,)),
    )


if __name__ == "__main__":
    B, P, E = 4, 8, 128            # embedding must be divisible by 16 heads
    HIDDEN = 4 * E

    key = jax.random.PRNGKey(0)
    kx, kp = jax.random.split(key)
    x = jax.random.normal(kx, (B, P, E), jnp.float32)
    params = init_params(kp, P, E, HIDDEN)
    prep = prepare_params(params)

    fwd = jax.jit(encoder_forward, static_argnames=("last_layer",))
    out = jax.block_until_ready(fwd(x, prep, last_layer=False))
    out_cls = jax.block_until_ready(fwd(x, prep, last_layer=True))

    assert out.shape == (B, P, E), out.shape
    assert out_cls.shape == (B, E), out_cls.shape
    assert bool(jnp.all(jnp.isfinite(out))) and bool(jnp.all(jnp.isfinite(out_cls)))

    # Parity vs. unfused f32 reference (bf16 matmuls + approx recip -> loose tol).
    ref = encoder_reference(x, params, last_layer=False)
    ref_cls = encoder_reference(x, params, last_layer=True)
    err = float(jnp.max(jnp.abs(out - ref)))
    err_cls = float(jnp.max(jnp.abs(out_cls - ref_cls)))
    assert err < 5e-2 and err_cls < 5e-2, (err, err_cls)

    print("KERNEL_OK")
</pallas_src>

<mosaic_0001>
module attributes {stable_mosaic.version = 11 : i64} {
  func.func @kernel(%arg0: i32, %arg1: memref<4x8x128xf32, #tpu.memory_space<vmem>>, %arg2: memref<8x128xf32, #tpu.memory_space<vmem>>, %arg3: memref<8x128xf32, #tpu.memory_space<vmem>>, %arg4: memref<128x384xbf16, #tpu.memory_space<vmem>>, %arg5: memref<1x384xf32, #tpu.memory_space<vmem>>, %arg6: memref<128x128xf32, #tpu.memory_space<vmem>>, %arg7: memref<128x128xbf16, #tpu.memory_space<vmem>>, %arg8: memref<1x128xf32, #tpu.memory_space<vmem>>, %arg9: memref<8x128xf32, #tpu.memory_space<vmem>>, %arg10: memref<8x128xf32, #tpu.memory_space<vmem>>, %arg11: memref<128x512xbf16, #tpu.memory_space<vmem>>, %arg12: memref<1x512xf32, #tpu.memory_space<vmem>>, %arg13: memref<512x128xbf16, #tpu.memory_space<vmem>>, %arg14: memref<1x128xf32, #tpu.memory_space<vmem>>, %arg15: memref<4x8x128xf32, #tpu.memory_space<vmem>>) attributes {dimension_semantics = [#tpu.dimension_semantics<arbitrary>], iteration_bounds = array<i64: 1>, scalar_prefetch = 0 : i64, scratch_operands = 0 : i64, tpu.core_type = #tpu.core_type<tc>, window_params = [{pipeline_mode = #tpu.pipeline_mode<synchronous>, transform_indices = @transform_0, window_bounds = array<i64: 4, 8, 128>}, {pipeline_mode = #tpu.pipeline_mode<synchronous>, transform_indices = @transform_1, window_bounds = array<i64: 8, 128>}, {pipeline_mode = #tpu.pipeline_mode<synchronous>, transform_indices = @transform_2, window_bounds = array<i64: 8, 128>}, {pipeline_mode = #tpu.pipeline_mode<synchronous>, transform_indices = @transform_3, window_bounds = array<i64: 128, 384>}, {pipeline_mode = #tpu.pipeline_mode<synchronous>, transform_indices = @transform_4, window_bounds = array<i64: 1, 384>}, {pipeline_mode = #tpu.pipeline_mode<synchronous>, transform_indices = @transform_5, window_bounds = array<i64: 128, 128>}, {pipeline_mode = #tpu.pipeline_mode<synchronous>, transform_indices = @transform_6, window_bounds = array<i64: 128, 128>}, {pipeline_mode = #tpu.pipeline_mode<synchronous>, transform_indices = @transform_7, window_bounds = array<i64: 1, 128>}, {pipeline_mode = #tpu.pipeline_mode<synchronous>, transform_indices = @transform_8, window_bounds = array<i64: 8, 128>}, {pipeline_mode = #tpu.pipeline_mode<synchronous>, transform_indices = @transform_9, window_bounds = array<i64: 8, 128>}, {pipeline_mode = #tpu.pipeline_mode<synchronous>, transform_indices = @transform_10, window_bounds = array<i64: 128, 512>}, {pipeline_mode = #tpu.pipeline_mode<synchronous>, transform_indices = @transform_11, window_bounds = array<i64: 1, 512>}, {pipeline_mode = #tpu.pipeline_mode<synchronous>, transform_indices = @transform_12, window_bounds = array<i64: 512, 128>}, {pipeline_mode = #tpu.pipeline_mode<synchronous>, transform_indices = @transform_13, window_bounds = array<i64: 1, 128>}, {pipeline_mode = #tpu.pipeline_mode<synchronous>, transform_indices = @transform_14, window_bounds = array<i64: 4, 8, 128>}]} {
    %c0 = arith.constant 0 : index
    %c0_0 = arith.constant 0 : index
    %c0_1 = arith.constant 0 : index
    %0 = vector.load %arg1[%c0, %c0_0, %c0_1] : memref<4x8x128xf32, #tpu.memory_space<vmem>>, vector<4x8x128xf32>
    %c0_2 = arith.constant 0 : index
    %c0_3 = arith.constant 0 : index
    %1 = vector.load %arg2[%c0_2, %c0_3] : memref<8x128xf32, #tpu.memory_space<vmem>>, vector<8x128xf32>
    %c0_4 = arith.constant 0 : index
    %c0_5 = arith.constant 0 : index
    %2 = vector.load %arg3[%c0_4, %c0_5] : memref<8x128xf32, #tpu.memory_space<vmem>>, vector<8x128xf32>
    %cst = arith.constant dense<0.000000e+00> : vector<4x8xf32>
    %3 = vector.multi_reduction <add>, %0, %cst [2] : vector<4x8x128xf32> to vector<4x8xf32>
    %4 = vector.shape_cast %3 : vector<4x8xf32> to vector<4x8x1xf32>
    %cst_6 = arith.constant 1.280000e+02 : f32
    %5 = vector.broadcast %cst_6 : f32 to vector<4x8x1xf32>
    %6 = arith.divf %4, %5 : vector<4x8x1xf32>
    %cst_7 = arith.constant dense<0.000000e+00> : vector<4x1xf32>
    %7 = vector.multi_reduction <add>, %6, %cst_7 [1] : vector<4x8x1xf32> to vector<4x1xf32>
    %8 = vector.shape_cast %7 : vector<4x1xf32> to vector<4x1x1xf32>
    %cst_8 = arith.constant 8.000000e+00 : f32
    %9 = vector.broadcast %cst_8 : f32 to vector<4x1x1xf32>
    %10 = arith.divf %8, %9 : vector<4x1x1xf32>
    %11 = vector.broadcast %10 : vector<4x1x1xf32> to vector<4x8x128xf32>
    %12 = arith.subf %0, %11 : vector<4x8x128xf32>
    %13 = arith.mulf %12, %12 : vector<4x8x128xf32>
    %cst_9 = arith.constant dense<0.000000e+00> : vector<4x8xf32>
    %14 = vector.multi_reduction <add>, %13, %cst_9 [2] : vector<4x8x128xf32> to vector<4x8xf32>
    %15 = vector.shape_cast %14 : vector<4x8xf32> to vector<4x8x1xf32>
    %cst_10 = arith.constant 1.280000e+02 : f32
    %16 = vector.broadcast %cst_10 : f32 to vector<4x8x1xf32>
    %17 = arith.divf %15, %16 : vector<4x8x1xf32>
    %cst_11 = arith.constant dense<0.000000e+00> : vector<4x1xf32>
    %18 = vector.multi_reduction <add>, %17, %cst_11 [1] : vector<4x8x1xf32> to vector<4x1xf32>
    %19 = vector.shape_cast %18 : vector<4x1xf32> to vector<4x1x1xf32>
    %cst_12 = arith.constant 8.000000e+00 : f32
    %20 = vector.broadcast %cst_12 : f32 to vector<4x1x1xf32>
    %21 = arith.divf %19, %20 : vector<4x1x1xf32>
    %cst_13 = arith.constant 9.99999974E-6 : f32
    %22 = vector.broadcast %cst_13 : f32 to vector<4x1x1xf32>
    %23 = arith.addf %21, %22 : vector<4x1x1xf32>
    %24 = math.rsqrt %23 : vector<4x1x1xf32>
    %25 = vector.broadcast %24 : vector<4x1x1xf32> to vector<4x8x128xf32>
    %26 = arith.mulf %12, %25 : vector<4x8x128xf32>
    %27 = vector.shape_cast %1 : vector<8x128xf32> to vector<1x8x128xf32>
    %28 = vector.broadcast %27 : vector<1x8x128xf32> to vector<4x8x128xf32>
    %29 = arith.mulf %26, %28 : vector<4x8x128xf32>
    %30 = vector.shape_cast %2 : vector<8x128xf32> to vector<1x8x128xf32>
    %31 = vector.broadcast %30 : vector<1x8x128xf32> to vector<4x8x128xf32>
    %32 = arith.addf %29, %31 : vector<4x8x128xf32>
    %33 = vector.shape_cast %32 : vector<4x8x128xf32> to vector<32x128xf32>
    %34 = arith.truncf %33 : vector<32x128xf32> to vector<32x128xbf16>
    %c0_14 = arith.constant 0 : index
    %c0_15 = arith.constant 0 : index
    %35 = vector.load %arg4[%c0_14, %c0_15] : memref<128x384xbf16, #tpu.memory_space<vmem>>, vector<128x384xbf16>
    %cst_16 = arith.constant dense<0.000000e+00> : vector<32x384xf32>
    %36 = tpu.matmul %34, %35, %cst_16 {dimension_numbers = #tpu.dot_dimension_numbers<[1], [0], [0], [1], [0, 0, 1, 1], [], []>} : vector<32x128xbf16>, vector<128x384xbf16>, vector<32x384xf32> -> vector<32x384xf32>
    %c0_17 = arith.constant 0 : index
    %c0_18 = arith.constant 0 : index
    %37 = vector.load %arg5[%c0_17, %c0_18] : memref<1x384xf32, #tpu.memory_space<vmem>>, vector<1x384xf32>
    %38 = vector.broadcast %37 : vector<1x384xf32> to vector<32x384xf32>
    %39 = arith.addf %36, %38 : vector<32x384xf32>
    %40 = vector.shape_cast %39 : vector<32x384xf32> to vector<4x8x384xf32>
    %41 = vector.extract_strided_slice %40 {offsets = [0, 0, 0], sizes = [4, 8, 128], strides = [1, 1, 1]} : vector<4x8x384xf32> to vector<4x8x128xf32>
    %42 = vector.extract_strided_slice %40 {offsets = [0, 0, 128], sizes = [4, 8, 128], strides = [1, 1, 1]} : vector<4x8x384xf32> to vector<4x8x128xf32>
    %43 = vector.extract_strided_slice %40 {offsets = [0, 0, 256], sizes = [4, 8, 128], strides = [1, 1, 1]} : vector<4x8x384xf32> to vector<4x8x128xf32>
    %44 = vector.shape_cast %41 : vector<4x8x128xf32> to vector<4x1x8x128xf32>
    %45 = vector.shape_cast %42 : vector<4x8x128xf32> to vector<1x4x8x128xf32>
    %46 = vector.broadcast %44 : vector<4x1x8x128xf32> to vector<4x4x8x128xf32>
    %47 = vector.broadcast %45 : vector<1x4x8x128xf32> to vector<4x4x8x128xf32>
    %48 = arith.mulf %46, %47 : vector<4x4x8x128xf32>
    %49 = vector.shape_cast %48 : vector<4x4x8x128xf32> to vector<128x128xf32>
    %c0_19 = arith.constant 0 : index
    %c0_20 = arith.constant 0 : index
    %50 = vector.load %arg6[%c0_19, %c0_20] : memref<128x128xf32, #tpu.memory_space<vmem>>, vector<128x128xf32>
    %cst_21 = arith.constant dense<0.000000e+00> : vector<128x128xf32>
    %51 = tpu.matmul %49, %50, %cst_21 {dimension_numbers = #tpu.dot_dimension_numbers<[1], [0], [0], [1], [0, 0, 1, 1], [], []>} : vector<128x128xf32>, vector<128x128xf32>, vector<128x128xf32> -> vector<128x128xf32>
    %52 = vector.shape_cast %51 : vector<128x128xf32> to vector<4x4x8x128xf32>
    %cst_22 = arith.constant dense<0xFF800000> : vector<4x8x128xf32>
    %53 = vector.multi_reduction <maximumf>, %52, %cst_22 [1] : vector<4x4x8x128xf32> to vector<4x8x128xf32>
    %54 = vector.shape_cast %53 : vector<4x8x128xf32> to vector<4x1x8x128xf32>
    %55 = vector.broadcast %54 : vector<4x1x8x128xf32> to vector<4x4x8x128xf32>
    %56 = arith.subf %52, %55 : vector<4x4x8x128xf32>
    %57 = math.exp %56 : vector<4x4x8x128xf32>
    %cst_23 = arith.constant dense<0.000000e+00> : vector<4x8x128xf32>
    %58 = vector.multi_reduction <add>, %57, %cst_23 [1] : vector<4x4x8x128xf32> to vector<4x8x128xf32>
    %59 = vector.shape_cast %58 : vector<4x8x128xf32> to vector<4x1x8x128xf32>
    %60 = tpu.reciprocal %59 {approx = true} : vector<4x1x8x128xf32> -> vector<4x1x8x128xf32>
    %61 = vector.broadcast %60 : vector<4x1x8x128xf32> to vector<4x4x8x128xf32>
    %62 = arith.mulf %57, %61 : vector<4x4x8x128xf32>
    %63 = vector.shape_cast %43 : vector<4x8x128xf32> to vector<1x4x8x128xf32>
    %64 = vector.broadcast %63 : vector<1x4x8x128xf32> to vector<4x4x8x128xf32>
    %65 = arith.mulf %62, %64 : vector<4x4x8x128xf32>
    %cst_24 = arith.constant dense<0.000000e+00> : vector<4x8x128xf32>
    %66 = vector.multi_reduction <add>, %65, %cst_24 [1] : vector<4x4x8x128xf32> to vector<4x8x128xf32>
    %67 = vector.shape_cast %66 : vector<4x8x128xf32> to vector<32x128xf32>
    %68 = arith.truncf %67 : vector<32x128xf32> to vector<32x128xbf16>
    %c0_25 = arith.constant 0 : index
    %c0_26 = arith.constant 0 : index
    %69 = vector.load %arg7[%c0_25, %c0_26] : memref<128x128xbf16, #tpu.memory_space<vmem>>, vector<128x128xbf16>
    %cst_27 = arith.constant dense<0.000000e+00> : vector<32x128xf32>
    %70 = tpu.matmul %68, %69, %cst_27 {dimension_numbers = #tpu.dot_dimension_numbers<[1], [0], [0], [1], [0, 0, 1, 1], [], []>} : vector<32x128xbf16>, vector<128x128xbf16>, vector<32x128xf32> -> vector<32x128xf32>
    %c0_28 = arith.constant 0 : index
    %c0_29 = arith.constant 0 : index
    %71 = vector.load %arg8[%c0_28, %c0_29] : memref<1x128xf32, #tpu.memory_space<vmem>>, vector<1x128xf32>
    %72 = vector.broadcast %71 : vector<1x128xf32> to vector<32x128xf32>
    %73 = arith.addf %70, %72 : vector<32x128xf32>
    %74 = vector.shape_cast %0 : vector<4x8x128xf32> to vector<32x128xf32>
    %75 = arith.addf %73, %74 : vector<32x128xf32>
    %76 = vector.shape_cast %75 : vector<32x128xf32> to vector<4x8x128xf32>
    %c0_30 = arith.constant 0 : index
    %c0_31 = arith.constant 0 : index
    %77 = vector.load %arg9[%c0_30, %c0_31] : memref<8x128xf32, #tpu.memory_space<vmem>>, vector<8x128xf32>
    %c0_32 = arith.constant 0 : index
    %c0_33 = arith.constant 0 : index
    %78 = vector.load %arg10[%c0_32, %c0_33] : memref<8x128xf32, #tpu.memory_space<vmem>>, vector<8x128xf32>
    %cst_34 = arith.constant dense<0.000000e+00> : vector<4x8xf32>
    %79 = vector.multi_reduction <add>, %76, %cst_34 [2] : vector<4x8x128xf32> to vector<4x8xf32>
    %80 = vector.shape_cast %79 : vector<4x8xf32> to vector<4x8x1xf32>
    %cst_35 = arith.constant 1.280000e+02 : f32
    %81 = vector.broadcast %cst_35 : f32 to vector<4x8x1xf32>
    %82 = arith.divf %80, %81 : vector<4x8x1xf32>
    %cst_36 = arith.constant dense<0.000000e+00> : vector<4x1xf32>
    %83 = vector.multi_reduction <add>, %82, %cst_36 [1] : vector<4x8x1xf32> to vector<4x1xf32>
    %84 = vector.shape_cast %83 : vector<4x1xf32> to vector<4x1x1xf32>
    %cst_37 = arith.constant 8.000000e+00 : f32
    %85 = vector.broadcast %cst_37 : f32 to vector<4x1x1xf32>
    %86 = arith.divf %84, %85 : vector<4x1x1xf32>
    %87 = vector.broadcast %86 : vector<4x1x1xf32> to vector<4x8x128xf32>
    %88 = arith.subf %76, %87 : vector<4x8x128xf32>
    %89 = arith.mulf %88, %88 : vector<4x8x128xf32>
    %cst_38 = arith.constant dense<0.000000e+00> : vector<4x8xf32>
    %90 = vector.multi_reduction <add>, %89, %cst_38 [2] : vector<4x8x128xf32> to vector<4x8xf32>
    %91 = vector.shape_cast %90 : vector<4x8xf32> to vector<4x8x1xf32>
    %cst_39 = arith.constant 1.280000e+02 : f32
    %92 = vector.broadcast %cst_39 : f32 to vector<4x8x1xf32>
    %93 = arith.divf %91, %92 : vector<4x8x1xf32>
    %cst_40 = arith.constant dense<0.000000e+00> : vector<4x1xf32>
    %94 = vector.multi_reduction <add>, %93, %cst_40 [1] : vector<4x8x1xf32> to vector<4x1xf32>
    %95 = vector.shape_cast %94 : vector<4x1xf32> to vector<4x1x1xf32>
    %cst_41 = arith.constant 8.000000e+00 : f32
    %96 = vector.broadcast %cst_41 : f32 to vector<4x1x1xf32>
    %97 = arith.divf %95, %96 : vector<4x1x1xf32>
    %cst_42 = arith.constant 9.99999974E-6 : f32
    %98 = vector.broadcast %cst_42 : f32 to vector<4x1x1xf32>
    %99 = arith.addf %97, %98 : vector<4x1x1xf32>
    %100 = math.rsqrt %99 : vector<4x1x1xf32>
    %101 = vector.broadcast %100 : vector<4x1x1xf32> to vector<4x8x128xf32>
    %102 = arith.mulf %88, %101 : vector<4x8x128xf32>
    %103 = vector.shape_cast %77 : vector<8x128xf32> to vector<1x8x128xf32>
    %104 = vector.broadcast %103 : vector<1x8x128xf32> to vector<4x8x128xf32>
    %105 = arith.mulf %102, %104 : vector<4x8x128xf32>
    %106 = vector.shape_cast %78 : vector<8x128xf32> to vector<1x8x128xf32>
    %107 = vector.broadcast %106 : vector<1x8x128xf32> to vector<4x8x128xf32>
    %108 = arith.addf %105, %107 : vector<4x8x128xf32>
    %109 = vector.shape_cast %108 : vector<4x8x128xf32> to vector<32x128xf32>
    %110 = arith.truncf %109 : vector<32x128xf32> to vector<32x128xbf16>
    %c0_43 = arith.constant 0 : index
    %c0_44 = arith.constant 0 : index
    %111 = vector.load %arg11[%c0_43, %c0_44] : memref<128x512xbf16, #tpu.memory_space<vmem>>, vector<128x512xbf16>
    %cst_45 = arith.constant dense<0.000000e+00> : vector<32x512xf32>
    %112 = tpu.matmul %110, %111, %cst_45 {dimension_numbers = #tpu.dot_dimension_numbers<[1], [0], [0], [1], [0, 0, 1, 1], [], []>} : vector<32x128xbf16>, vector<128x512xbf16>, vector<32x512xf32> -> vector<32x512xf32>
    %c0_46 = arith.constant 0 : index
    %c0_47 = arith.constant 0 : index
    %113 = vector.load %arg12[%c0_46, %c0_47] : memref<1x512xf32, #tpu.memory_space<vmem>>, vector<1x512xf32>
    %114 = vector.broadcast %113 : vector<1x512xf32> to vector<32x512xf32>
    %115 = arith.addf %112, %114 : vector<32x512xf32>
    %116 = arith.mulf %115, %115 : vector<32x512xf32>
    %117 = arith.mulf %115, %116 : vector<32x512xf32>
    %cst_48 = arith.constant 4.471500e-02 : f32
    %118 = vector.broadcast %cst_48 : f32 to vector<32x512xf32>
    %119 = arith.mulf %118, %117 : vector<32x512xf32>
    %120 = arith.addf %115, %119 : vector<32x512xf32>
    %cst_49 = arith.constant 0.797884583 : f32
    %121 = vector.broadcast %cst_49 : f32 to vector<32x512xf32>
    %122 = arith.mulf %121, %120 : vector<32x512xf32>
    %123 = math.tanh %122 : vector<32x512xf32>
    %cst_50 = arith.constant 1.000000e+00 : f32
    %124 = vector.broadcast %cst_50 : f32 to vector<32x512xf32>
    %125 = arith.addf %124, %123 : vector<32x512xf32>
    %cst_51 = arith.constant 5.000000e-01 : f32
    %126 = vector.broadcast %cst_51 : f32 to vector<32x512xf32>
    %127 = arith.mulf %126, %125 : vector<32x512xf32>
    %128 = arith.mulf %115, %127 : vector<32x512xf32>
    %129 = arith.truncf %128 : vector<32x512xf32> to vector<32x512xbf16>
    %c0_52 = arith.constant 0 : index
    %c0_53 = arith.constant 0 : index
    %130 = vector.load %arg13[%c0_52, %c0_53] : memref<512x128xbf16, #tpu.memory_space<vmem>>, vector<512x128xbf16>
    %cst_54 = arith.constant dense<0.000000e+00> : vector<32x128xf32>
    %131 = tpu.matmul %129, %130, %cst_54 {dimension_numbers = #tpu.dot_dimension_numbers<[1], [0], [0], [1], [0, 0, 1, 1], [], []>} : vector<32x512xbf16>, vector<512x128xbf16>, vector<32x128xf32> -> vector<32x128xf32>
    %c0_55 = arith.constant 0 : index
    %c0_56 = arith.constant 0 : index
    %132 = vector.load %arg14[%c0_55, %c0_56] : memref<1x128xf32, #tpu.memory_space<vmem>>, vector<1x128xf32>
    %133 = vector.broadcast %132 : vector<1x128xf32> to vector<32x128xf32>
    %134 = arith.addf %131, %133 : vector<32x128xf32>
    %135 = vector.shape_cast %134 : vector<32x128xf32> to vector<4x8x128xf32>
    %136 = arith.addf %135, %76 : vector<4x8x128xf32>
    %c0_57 = arith.constant 0 : index
    %c0_58 = arith.constant 0 : index
    %c0_59 = arith.constant 0 : index
    %137 = vector.load %arg15[%c0_57, %c0_58, %c0_59] : memref<4x8x128xf32, #tpu.memory_space<vmem>>, vector<4x8x128xf32>
    tpu.vector_store %arg15[%c0_57, %c0_58, %c0_59], %136 {strides = array<i32>} : memref<4x8x128xf32, #tpu.memory_space<vmem>>, vector<4x8x128xf32>,
    return
  }
  func.func @transform_0(%arg0: i32) -> (i32, i32, i32) {
    %c0_i32 = arith.constant 0 : i32
    %c0_i32_0 = arith.constant 0 : i32
    %c0_i32_1 = arith.constant 0 : i32
    %c0_i32_2 = arith.constant 0 : i32
    return %c0_i32, %c0_i32_0, %c0_i32_1 : i32, i32, i32
  }
  func.func @transform_1(%arg0: i32) -> (i32, i32) {
    %c0_i32 = arith.constant 0 : i32
    %c0_i32_0 = arith.constant 0 : i32
    %c0_i32_1 = arith.constant 0 : i32
    return %c0_i32, %c0_i32_0 : i32, i32
  }
  func.func @transform_2(%arg0: i32) -> (i32, i32) {
    %c0_i32 = arith.constant 0 : i32
    %c0_i32_0 = arith.constant 0 : i32
    %c0_i32_1 = arith.constant 0 : i32
    return %c0_i32, %c0_i32_0 : i32, i32
  }
  func.func @transform_3(%arg0: i32) -> (i32, i32) {
    %c0_i32 = arith.constant 0 : i32
    %c0_i32_0 = arith.constant 0 : i32
    %c0_i32_1 = arith.constant 0 : i32
    return %c0_i32, %c0_i32_0 : i32, i32
  }
  func.func @transform_4(%arg0: i32) -> (i32, i32) {
    %c0_i32 = arith.constant 0 : i32
    %c0_i32_0 = arith.constant 0 : i32
    %c0_i32_1 = arith.constant 0 : i32
    return %c0_i32, %c0_i32_0 : i32, i32
  }
  func.func @transform_5(%arg0: i32) -> (i32, i32) {
    %c0_i32 = arith.constant 0 : i32
    %c0_i32_0 = arith.constant 0 : i32
    %c0_i32_1 = arith.constant 0 : i32
    return %c0_i32, %c0_i32_0 : i32, i32
  }
  func.func @transform_6(%arg0: i32) -> (i32, i32) {
    %c0_i32 = arith.constant 0 : i32
    %c0_i32_0 = arith.constant 0 : i32
    %c0_i32_1 = arith.constant 0 : i32
    return %c0_i32, %c0_i32_0 : i32, i32
  }
  func.func @transform_7(%arg0: i32) -> (i32, i32) {
    %c0_i32 = arith.constant 0 : i32
    %c0_i32_0 = arith.constant 0 : i32
    %c0_i32_1 = arith.constant 0 : i32
    return %c0_i32, %c0_i32_0 : i32, i32
  }
  func.func @transform_8(%arg0: i32) -> (i32, i32) {
    %c0_i32 = arith.constant 0 : i32
    %c0_i32_0 = arith.constant 0 : i32
    %c0_i32_1 = arith.constant 0 : i32
    return %c0_i32, %c0_i32_0 : i32, i32
  }
  func.func @transform_9(%arg0: i32) -> (i32, i32) {
    %c0_i32 = arith.constant 0 : i32
    %c0_i32_0 = arith.constant 0 : i32
    %c0_i32_1 = arith.constant 0 : i32
    return %c0_i32, %c0_i32_0 : i32, i32
  }
  func.func @transform_10(%arg0: i32) -> (i32, i32) {
    %c0_i32 = arith.constant 0 : i32
    %c0_i32_0 = arith.constant 0 : i32
    %c0_i32_1 = arith.constant 0 : i32
    return %c0_i32, %c0_i32_0 : i32, i32
  }
  func.func @transform_11(%arg0: i32) -> (i32, i32) {
    %c0_i32 = arith.constant 0 : i32
    %c0_i32_0 = arith.constant 0 : i32
    %c0_i32_1 = arith.constant 0 : i32
    return %c0_i32, %c0_i32_0 : i32, i32
  }
  func.func @transform_12(%arg0: i32) -> (i32, i32) {
    %c0_i32 = arith.constant 0 : i32
    %c0_i32_0 = arith.constant 0 : i32
    %c0_i32_1 = arith.constant 0 : i32
    return %c0_i32, %c0_i32_0 : i32, i32
  }
  func.func @transform_13(%arg0: i32) -> (i32, i32) {
    %c0_i32 = arith.constant 0 : i32
    %c0_i32_0 = arith.constant 0 : i32
    %c0_i32_1 = arith.constant 0 : i32
    return %c0_i32, %c0_i32_0 : i32, i32
  }
  func.func @transform_14(%arg0: i32) -> (i32, i32, i32) {
    %c0_i32 = arith.constant 0 : i32
    %c0_i32_0 = arith.constant 0 : i32
    %c0_i32_1 = arith.constant 0 : i32
    %c0_i32_2 = arith.constant 0 : i32
    return %c0_i32, %c0_i32_0, %c0_i32_1 : i32, i32, i32
  }
}

</mosaic_0001>

<llo_original>
// kernel: encoder_forward.1
$region0: #{encoder_forward.1}
  #allocation0 [shape = 'u32[]', space=smem, size = 0x4, offset = 0x4, fixed_abs, tag = 'smem constant byte address 0x4 - core index']
  #allocation1 [shape = 'u32[144,128]{1,0:T(1,128)}', space=vmem, size = 0x12000, scoped, tag = 'internal scratch']
  %s0 = inlined_call_operand.hbm [shape: f32[4,8,128], index: 0, kind: input, shape index: {}]
  %s1 = inlined_call_operand.vmem [shape: f32[8,128], index: 1, kind: input, shape index: {}]
  %s2 = inlined_call_operand.vmem [shape: f32[8,128], index: 2, kind: input, shape index: {}]
  %s3 = inlined_call_operand.hbm [shape: bf16[128,384], index: 3, kind: input, shape index: {}]
  %s4 = inlined_call_operand.hbm [shape: f32[1,384], index: 4, kind: input, shape index: {}]
  %s5 = inlined_call_operand.hbm [shape: f32[128,128], index: 5, kind: input, shape index: {}]
  %s6 = inlined_call_operand.hbm [shape: bf16[128,128], index: 6, kind: input, shape index: {}]
  %s7 = inlined_call_operand.vmem [shape: f32[1,128], index: 7, kind: input, shape index: {}]
  %s8 = inlined_call_operand.vmem [shape: f32[8,128], index: 8, kind: input, shape index: {}]
  %s9 = inlined_call_operand.hbm [shape: f32[8,128], index: 9, kind: input, shape index: {}]
  %s10 = inlined_call_operand.hbm [shape: bf16[128,512], index: 10, kind: input, shape index: {}]
  %s11 = inlined_call_operand.hbm [shape: f32[1,512], index: 11, kind: input, shape index: {}]
  %s12 = inlined_call_operand.hbm [shape: bf16[512,128], index: 12, kind: input, shape index: {}]
  %s13 = inlined_call_operand.vmem [shape: f32[1,128], index: 13, kind: input, shape index: {}]
  %s14 = inlined_call_operand.hbm [shape: f32[4,8,128], index: 14, kind: output, shape index: {}]
  %s15 = sld [smem:[#allocation0]]
  $region102: #{encoder_forward.1} parent=0
    _
  %s17 = ssub.s32 1, %s15
  %s18 = scalar_select 0, %s17, %s15
  $region1: #{encoder_forward.1} parent=0
    #allocation2 [shape = 'u8[16384]{0}', space=vmem, size = 0x4000, scoped, tag = 'input window, operand 0, single buffered']
    #allocation3 [shape = 's32[1]{0}', space=sflag, size = 0x4, scoped, tag = 'scoped memory for encoder_forward.1']
    #allocation4 [shape = 's32[1]{0}', space=sflag, size = 0x4, scoped, tag = 'scoped memory for encoder_forward.1']
    #allocation5 [shape = 'u8[98304]{0}', space=vmem, size = 0x18000, scoped, tag = 'input window, operand 3, single buffered']
    #allocation6 [shape = 's32[1]{0}', space=sflag, size = 0x4, scoped, tag = 'scoped memory for encoder_forward.1']
    #allocation7 [shape = 'u8[1536]{0}', space=vmem, size = 0x800, scoped, tag = 'input window, operand 4, single buffered']
    #allocation8 [shape = 'u8[65536]{0}', space=vmem, size = 0x10000, scoped, tag = 'input window, operand 5, single buffered']
    #allocation9 [shape = 's32[1]{0}', space=sflag, size = 0x4, scoped, tag = 'scoped memory for encoder_forward.1']
    #allocation10 [shape = 'u8[32768]{0}', space=vmem, size = 0x8000, scoped, tag = 'input window, operand 6, single buffered']
    #allocation11 [shape = 'u8[4096]{0}', space=vmem, size = 0x1000, scoped, tag = 'input window, operand 9, single buffered']
    #allocation12 [shape = 's32[1]{0}', space=sflag, size = 0x4, scoped, tag = 'scoped memory for encoder_forward.1']
    #allocation13 [shape = 'u8[131072]{0}', space=vmem, size = 0x20000, scoped, tag = 'input window, operand 10, single buffered']
    #allocation14 [shape = 'u8[2048]{0}', space=vmem, size = 0x800, scoped, tag = 'input window, operand 11, single buffered']
    #allocation15 [shape = 's32[1]{0}', space=sflag, size = 0x4, scoped, tag = 'scoped memory for encoder_forward.1']
    #allocation16 [shape = 'u8[131072]{0}', space=vmem, size = 0x20000, scoped, tag = 'input window, operand 12, single buffered']
    #allocation17 [shape = 'u8[16384]{0}', space=vmem, size = 0x4000, scoped, tag = 'output window, operand 0, single buffered']
    %19 = vsyncpa [#allocation3], 0
    %20 = vsyncpa [#allocation6], 0
    %21 = vsyncpa [#allocation9], 0
    %22 = vsyncpa [#allocation12], 0
    %23 = vsyncpa [#allocation15], 0
    %24 = vsyncpa [#allocation4], 0
    // Predicated region
    $region2: #{encoder_forward.1} parent=1 // pred_check
      _
    $region3: #{encoder_forward.1} parent=1 // pred_check_branch
      %26 = sbr.rel (0) target = $region5
    $region4: #{encoder_forward.1} parent=1 // pred_region
      %s28 = ssub.s32 512, 512
      %29 = vsyncadd [#allocation3], %s28
      %s30 = sshll.u32 [#allocation2], 4
      %s31 = int_to_ptr.vmem [resolvable:$true] %s30
      %36 = dma.hbm_to_vmem [thread:$0]  %s0, 512, %s31, [#allocation3], 128, 128, 8
    $region5: #{encoder_forward.1} parent=1 // pred_fallthru
      _
    // Predicated region
    $region6: #{encoder_forward.1} parent=1 // pred_check
      _
    $region7: #{encoder_forward.1} parent=1 // pred_check_branch
      %38 = sbr.rel (0) target = $region9
    $region8: #{encoder_forward.1} parent=1 // pred_region
      _
    $region9: #{encoder_forward.1} parent=1 // pred_fallthru
      _
    // Predicated region
    $region10: #{encoder_forward.1} parent=1 // pred_check
      _
    $region11: #{encoder_forward.1} parent=1 // pred_check_branch
      %40 = sbr.rel (0) target = $region13
    $region12: #{encoder_forward.1} parent=1 // pred_region
      _
    $region13: #{encoder_forward.1} parent=1 // pred_fallthru
      _
    // Predicated region
    $region14: #{encoder_forward.1} parent=1 // pred_check
      _
    $region15: #{encoder_forward.1} parent=1 // pred_check_branch
      %42 = sbr.rel (0) target = $region17
    $region16: #{encoder_forward.1} parent=1 // pred_region
      %s44 = ssub.s32 3072, 3072
      %45 = vsyncadd [#allocation6], %s44
      %s46 = sshll.u32 [#allocation5], 4
      %s47 = int_to_ptr.vmem [resolvable:$true] %s46
      %52 = dma.hbm_to_vmem [thread:$0]  %s3, 3072, %s47, [#allocation6], 192, 192, 12
    $region17: #{encoder_forward.1} parent=1 // pred_fallthru
      _
    // Predicated region
    $region18: #{encoder_forward.1} parent=1 // pred_check
      _
    $region19: #{encoder_forward.1} parent=1 // pred_check_branch
      %54 = sbr.rel (0) target = $region21
    $region20: #{encoder_forward.1} parent=1 // pred_region
      %s56 = ssub.s32 48, 48
      %57 = vsyncadd [#allocation6], %s56
      %s59 = sshll.u32 [#allocation7], 4
      %s60 = int_to_ptr.vmem [resolvable:$true] %s59
      %62 = dma.hbm_to_vmem [thread:$0]  %s4, 48, %s60, [#allocation6]
    $region21: #{encoder_forward.1} parent=1 // pred_fallthru
      _
    // Predicated region
    $region22: #{encoder_forward.1} parent=1 // pred_check
      _
    $region23: #{encoder_forward.1} parent=1 // pred_check_branch
      %64 = sbr.rel (0) target = $region25
    $region24: #{encoder_forward.1} parent=1 // pred_region
      %s66 = ssub.s32 2048, 2048
      %67 = vsyncadd [#allocation9], %s66
      %s68 = sshll.u32 [#allocation8], 4
      %s69 = int_to_ptr.vmem [resolvable:$true] %s68
      %74 = dma.hbm_to_vmem [thread:$0]  %s5, 2048, %s69, [#allocation9], 128, 128, 8
    $region25: #{encoder_forward.1} parent=1 // pred_fallthru
      _
    // Predicated region
    $region26: #{encoder_forward.1} parent=1 // pred_check
      _
    $region27: #{encoder_forward.1} parent=1 // pred_check_branch
      %76 = sbr.rel (0) target = $region29
    $region28: #{encoder_forward.1} parent=1 // pred_region
      %s78 = ssub.s32 1024, 1024
      %79 = vsyncadd [#allocation9], %s78
      %s80 = sshll.u32 [#allocation10], 4
      %s81 = int_to_ptr.vmem [resolvable:$true] %s80
      %86 = dma.hbm_to_vmem [thread:$0]  %s6, 1024, %s81, [#allocation9], 64, 64, 4
    $region29: #{encoder_forward.1} parent=1 // pred_fallthru
      _
    // Predicated region
    $region30: #{encoder_forward.1} parent=1 // pred_check
      _
    $region31: #{encoder_forward.1} parent=1 // pred_check_branch
      %88 = sbr.rel (0) target = $region33
    $region32: #{encoder_forward.1} parent=1 // pred_region
      _
    $region33: #{encoder_forward.1} parent=1 // pred_fallthru
      _
    // Predicated region
    $region34: #{encoder_forward.1} parent=1 // pred_check
      _
    $region35: #{encoder_forward.1} parent=1 // pred_check_branch
      %90 = sbr.rel (0) target = $region37
    $region36: #{encoder_forward.1} parent=1 // pred_region
      _
    $region37: #{encoder_forward.1} parent=1 // pred_fallthru
      _
    // Predicated region
    $region38: #{encoder_forward.1} parent=1 // pred_check
      _
    $region39: #{encoder_forward.1} parent=1 // pred_check_branch
      %92 = sbr.rel (0) target = $region41
    $region40: #{encoder_forward.1} parent=1 // pred_region
      %s94 = ssub.s32 128, 128
      %95 = vsyncadd [#allocation12], %s94
      %s97 = sshll.u32 [#allocation11], 4
      %s98 = int_to_ptr.vmem [resolvable:$true] %s97
      %100 = dma.hbm_to_vmem [thread:$0]  %s9, 128, %s98, [#allocation12]
    $region41: #{encoder_forward.1} parent=1 // pred_fallthru
      _
    // Predicated region
    $region42: #{encoder_forward.1} parent=1 // pred_check
      _
    $region43: #{encoder_forward.1} parent=1 // pred_check_branch
      %102 = sbr.rel (0) target = $region45
    $region44: #{encoder_forward.1} parent=1 // pred_region
      %s104 = ssub.s32 4096, 4096
      %105 = vsyncadd [#allocation12], %s104
      %s106 = sshll.u32 [#allocation13], 4
      %s107 = int_to_ptr.vmem [resolvable:$true] %s106
      %112 = dma.hbm_to_vmem [thread:$0]  %s10, 4096, %s107, [#allocation12], 256, 256, 16
    $region45: #{encoder_forward.1} parent=1 // pred_fallthru
      _
    // Predicated region
    $region46: #{encoder_forward.1} parent=1 // pred_check
      _
    $region47: #{encoder_forward.1} parent=1 // pred_check_branch
      %114 = sbr.rel (0) target = $region49
    $region48: #{encoder_forward.1} parent=1 // pred_region
      %s116 = ssub.s32 64, 64
      %117 = vsyncadd [#allocation15], %s116
      %s119 = sshll.u32 [#allocation14], 4
      %s120 = int_to_ptr.vmem [resolvable:$true] %s119
      %122 = dma.hbm_to_vmem [thread:$0]  %s11, 64, %s120, [#allocation15]
    $region49: #{encoder_forward.1} parent=1 // pred_fallthru
      _
    // Predicated region
    $region50: #{encoder_forward.1} parent=1 // pred_check
      _
    $region51: #{encoder_forward.1} parent=1 // pred_check_branch
      %124 = sbr.rel (0) target = $region53
    $region52: #{encoder_forward.1} parent=1 // pred_region
      %s126 = ssub.s32 4096, 4096
      %127 = vsyncadd [#allocation15], %s126
      %s128 = sshll.u32 [#allocation16], 4
      %s129 = int_to_ptr.vmem [resolvable:$true] %s128
      %134 = dma.hbm_to_vmem [thread:$0]  %s12, 4096, %s129, [#allocation15], 64, 64, 4
    $region53: #{encoder_forward.1} parent=1 // pred_fallthru
      _
    // Predicated region
    $region54: #{encoder_forward.1} parent=1 // pred_check
      _
    $region55: #{encoder_forward.1} parent=1 // pred_check_branch
      %136 = sbr.rel (0) target = $region57
    $region56: #{encoder_forward.1} parent=1 // pred_region
      _
    $region57: #{encoder_forward.1} parent=1 // pred_fallthru
      _
    // Predicated region
    $region58: #{encoder_forward.1} parent=1 // pred_check
      _
    $region59: #{encoder_forward.1} parent=1 // pred_check_branch
      %138 = sbr.rel (0) target = $region61
    $region60: #{encoder_forward.1} parent=1 // pred_region
      %139 = dma.done [#allocation3], 512
    $region61: #{encoder_forward.1} parent=1 // pred_fallthru
      _
    // Predicated region
    $region62: #{encoder_forward.1} parent=1 // pred_check
      _
    $region63: #{encoder_forward.1} parent=1 // pred_check_branch
      %141 = sbr.rel (0) target = $region65
    $region64: #{encoder_forward.1} parent=1 // pred_region
      %142 = dma.done [#allocation6], 3072
    $region65: #{encoder_forward.1} parent=1 // pred_fallthru
      _
    // Predicated region
    $region66: #{encoder_forward.1} parent=1 // pred_check
      _
    $region67: #{encoder_forward.1} parent=1 // pred_check_branch
      %144 = sbr.rel (0) target = $region69
    $region68: #{encoder_forward.1} parent=1 // pred_region
      %145 = dma.done [#allocation6], 48
    $region69: #{encoder_forward.1} parent=1 // pred_fallthru
      _
    // Predicated region
    $region70: #{encoder_forward.1} parent=1 // pred_check
      _
    $region71: #{encoder_forward.1} parent=1 // pred_check_branch
      %147 = sbr.rel (0) target = $region73
    $region72: #{encoder_forward.1} parent=1 // pred_region
      %148 = dma.done [#allocation9], 2048
    $region73: #{encoder_forward.1} parent=1 // pred_fallthru
      _
    // Predicated region
    $region74: #{encoder_forward.1} parent=1 // pred_check
      _
    $region75: #{encoder_forward.1} parent=1 // pred_check_branch
      %150 = sbr.rel (0) target = $region77
    $region76: #{encoder_forward.1} parent=1 // pred_region
      %151 = dma.done [#allocation9], 1024
    $region77: #{encoder_forward.1} parent=1 // pred_fallthru
      _
    // Predicated region
    $region78: #{encoder_forward.1} parent=1 // pred_check
      _
    $region79: #{encoder_forward.1} parent=1 // pred_check_branch
      %153 = sbr.rel (0) target = $region81
    $region80: #{encoder_forward.1} parent=1 // pred_region
      %154 = dma.done [#allocation12], 128
    $region81: #{encoder_forward.1} parent=1 // pred_fallthru
      _
    // Predicated region
    $region82: #{encoder_forward.1} parent=1 // pred_check
      _
    $region83: #{encoder_forward.1} parent=1 // pred_check_branch
      %156 = sbr.rel (0) target = $region85
    $region84: #{encoder_forward.1} parent=1 // pred_region
      %157 = dma.done [#allocation12], 4096
    $region85: #{encoder_forward.1} parent=1 // pred_fallthru
      _
    // Predicated region
    $region86: #{encoder_forward.1} parent=1 // pred_check
      _
    $region87: #{encoder_forward.1} parent=1 // pred_check_branch
      %159 = sbr.rel (0) target = $region89
    $region88: #{encoder_forward.1} parent=1 // pred_region
      %160 = dma.done [#allocation15], 64
    $region89: #{encoder_forward.1} parent=1 // pred_fallthru
      _
    // Predicated region
    $region90: #{encoder_forward.1} parent=1 // pred_check
      _
    $region91: #{encoder_forward.1} parent=1 // pred_check_branch
      %162 = sbr.rel (0) target = $region93
    $region92: #{encoder_forward.1} parent=1 // pred_region
      %163 = dma.done [#allocation15], 4096
    $region93: #{encoder_forward.1} parent=1 // pred_fallthru
      _
    %v165 = vld [vmem:[#allocation2] sm:$0xff]
    %v166 = vld [vmem:[#allocation2 + $0x8] sm:$0xff]
    %v167 = vld [vmem:[#allocation2 + $0x10] sm:$0xff]
    %v168 = vld [vmem:[#allocation2 + $0x18] sm:$0xff]
    %v169 = vld [vmem:[%s1] sm:$0xff]
    %v170 = vld [vmem:[%s2] sm:$0xff]
    %171 = vadd.xlane.f32.xlu0 %v165
    %v172 = vpop.xlane.xlu0 %171
    %173 = vadd.xlane.f32.xlu0 %v166
    %v174 = vpop.xlane.xlu0 %173
    %175 = vadd.xlane.f32.xlu0 %v167
    %v176 = vpop.xlane.xlu0 %175
    %177 = vadd.xlane.f32.xlu0 %v168
    %v178 = vpop.xlane.xlu0 %177
    %v179 = vrcp.pop 128.0
    %v180 = vmul.f32 %v172, %v179
    %v181 = vmul.f32 %v174, %v179
    %v182 = vmul.f32 %v176, %v179
    %v183 = vmul.f32 %v178, %v179
    %v184 = vrot.slane %v180, 4
    %v185 = vadd.f32 %v180, %v184
    %v186 = vrot.slane %v185, 2
    %v187 = vadd.f32 %v185, %v186
    %v188 = vrot.slane %v187, 1
    %v189 = vadd.f32 %v187, %v188
    %v190 = vrot.slane %v181, 4
    %v191 = vadd.f32 %v181, %v190
    %v192 = vrot.slane %v191, 2
    %v193 = vadd.f32 %v191, %v192
    %v194 = vrot.slane %v193, 1
    %v195 = vadd.f32 %v193, %v194
    %v196 = vrot.slane %v182, 4
    %v197 = vadd.f32 %v182, %v196
    %v198 = vrot.slane %v197, 2
    %v199 = vadd.f32 %v197, %v198
    %v200 = vrot.slane %v199, 1
    %v201 = vadd.f32 %v199, %v200
    %v202 = vrot.slane %v183, 4
    %v203 = vadd.f32 %v183, %v202
    %v204 = vrot.slane %v203, 2
    %v205 = vadd.f32 %v203, %v204
    %v206 = vrot.slane %v205, 1
    %v207 = vadd.f32 %v205, %v206
    %v208 = vrcp.pop 8.0
    %v209 = vmul.f32 %v189, %v208
    %v210 = vmul.f32 %v195, %v208
    %v211 = vmul.f32 %v201, %v208
    %v212 = vmul.f32 %v207, %v208
    %v213 = vsub.f32 %v165, %v209
    %v214 = vsub.f32 %v166, %v210
    %v215 = vsub.f32 %v167, %v211
    %v216 = vsub.f32 %v168, %v212
    %v217 = vmul.f32 %v213, %v213
    %v218 = vmul.f32 %v214, %v214
    %v219 = vmul.f32 %v215, %v215
    %v220 = vmul.f32 %v216, %v216
    %221 = vadd.xlane.f32.xlu0 %v217
    %v222 = vpop.xlane.xlu0 %221
    %223 = vadd.xlane.f32.xlu0 %v218
    %v224 = vpop.xlane.xlu0 %223
    %225 = vadd.xlane.f32.xlu0 %v219
    %v226 = vpop.xlane.xlu0 %225
    %227 = vadd.xlane.f32.xlu0 %v220
    %v228 = vpop.xlane.xlu0 %227
    %v229 = vmul.f32 %v222, %v179
    %v230 = vmul.f32 %v224, %v179
    %v231 = vmul.f32 %v226, %v179
    %v232 = vmul.f32 %v228, %v179
    %v233 = vrot.slane %v229, 4
    %v234 = vadd.f32 %v229, %v233
    %v235 = vrot.slane %v234, 2
    %v236 = vadd.f32 %v234, %v235
    %v237 = vrot.slane %v236, 1
    %v238 = vadd.f32 %v236, %v237
    %v239 = vrot.slane %v230, 4
    %v240 = vadd.f32 %v230, %v239
    %v241 = vrot.slane %v240, 2
    %v242 = vadd.f32 %v240, %v241
    %v243 = vrot.slane %v242, 1
    %v244 = vadd.f32 %v242, %v243
    %v245 = vrot.slane %v231, 4
    %v246 = vadd.f32 %v231, %v245
    %v247 = vrot.slane %v246, 2
    %v248 = vadd.f32 %v246, %v247
    %v249 = vrot.slane %v248, 1
    %v250 = vadd.f32 %v248, %v249
    %v251 = vrot.slane %v232, 4
    %v252 = vadd.f32 %v232, %v251
    %v253 = vrot.slane %v252, 2
    %v254 = vadd.f32 %v252, %v253
    %v255 = vrot.slane %v254, 1
    %v256 = vadd.f32 %v254, %v255
    %v257 = vmul.f32 %v238, %v208
    %v258 = vmul.f32 %v244, %v208
    %v259 = vmul.f32 %v250, %v208
    %v260 = vmul.f32 %v256, %v208
    %v261 = vadd.f32 %v257, 1e-05
    %v262 = vadd.f32 %v258, 1e-05
    %v263 = vadd.f32 %v259, 1e-05
    %v264 = vadd.f32 %v260, 1e-05
    %v265 = vrsqrt.pop %v261
    %v266 = vrsqrt.pop %v262
    %v267 = vrsqrt.pop %v263
    %v268 = vrsqrt.pop %v264
    %v269 = vmul.f32 %v213, %v265
    %v270 = vmul.f32 %v214, %v266
    %v271 = vmul.f32 %v215, %v267
    %v272 = vmul.f32 %v216, %v268
    %v273 = vmul.f32 %v269, %v169
    %v274 = vmul.f32 %v270, %v169
    %v275 = vmul.f32 %v271, %v169
    %v276 = vmul.f32 %v272, %v169
    %v277 = vadd.f32 %v273, %v170
    %v278 = vadd.f32 %v274, %v170
    %v279 = vadd.f32 %v275, %v170
    %v280 = vadd.f32 %v276, %v170
    %v281 = vpack.c.bf16 %v278, %v277
    %v282 = vpack.c.bf16 %v280, %v279
    %v283 = vld [vmem:[#allocation5] sm:$0xff]
    %v284 = vld [vmem:[#allocation5 + $0x8] sm:$0xf]
    %v285 = vld [vmem:[#allocation5 + $0xc] sm:$0xff]
    %v286 = vld [vmem:[#allocation5 + $0x14] sm:$0xf]
    %v287 = vld [vmem:[#allocation5 + $0x18] sm:$0xff]
    %v288 = vld [vmem:[#allocation5 + $0x20] sm:$0xf]
    %v289 = vld [vmem:[#allocation5 + $0x24] sm:$0xff]
    %v290 = vld [vmem:[#allocation5 + $0x2c] sm:$0xf]
    %v291 = vld [vmem:[#allocation5 + $0x30] sm:$0xff]
    %v292 = vld [vmem:[#allocation5 + $0x38] sm:$0xf]
    %v293 = vld [vmem:[#allocation5 + $0x3c] sm:$0xff]
    %v294 = vld [vmem:[#allocation5 + $0x44] sm:$0xf]
    %v295 = vld [vmem:[#allocation5 + $0x48] sm:$0xff]
    %v296 = vld [vmem:[#allocation5 + $0x50] sm:$0xf]
    %v297 = vld [vmem:[#allocation5 + $0x54] sm:$0xff]
    %v298 = vld [vmem:[#allocation5 + $0x5c] sm:$0xf]
    %v299 = vld [vmem:[#allocation5 + $0x60] sm:$0xff]
    %v300 = vld [vmem:[#allocation5 + $0x68] sm:$0xf]
    %v301 = vld [vmem:[#allocation5 + $0x6c] sm:$0xff]
    %v302 = vld [vmem:[#allocation5 + $0x74] sm:$0xf]
    %v303 = vld [vmem:[#allocation5 + $0x78] sm:$0xff]
    %v304 = vld [vmem:[#allocation5 + $0x80] sm:$0xf]
    %v305 = vld [vmem:[#allocation5 + $0x84] sm:$0xff]
    %v306 = vld [vmem:[#allocation5 + $0x8c] sm:$0xf]
    %v307 = vld [vmem:[#allocation5 + $0x90] sm:$0xff]
    %v308 = vld [vmem:[#allocation5 + $0x98] sm:$0xf]
    %v309 = vld [vmem:[#allocation5 + $0x9c] sm:$0xff]
    %v310 = vld [vmem:[#allocation5 + $0xa4] sm:$0xf]
    %v311 = vld [vmem:[#allocation5 + $0xa8] sm:$0xff]
    %v312 = vld [vmem:[#allocation5 + $0xb0] sm:$0xf]
    %v313 = vld [vmem:[#allocation5 + $0xb4] sm:$0xff]
    %v314 = vld [vmem:[#allocation5 + $0xbc] sm:$0xf]
    %v315 = vld [vmem:[#allocation7] sm:$0x7]
    %v317 = vlaneseq
    %v318 = vshrl.u32 %v317, 7
    %v319 = vsub.s32 0, %v318
    %v320 = vrot.slane %v315, %v319
    %v321 = vlaneseq
    %v322 = vshrl.u32 %v321, 7
    %v323 = vsub.s32 1, %v322
    %v324 = vrot.slane %v315, %v323
    %v325 = vlaneseq
    %v326 = vshrl.u32 %v325, 7
    %v327 = vsub.s32 2, %v326
    %v328 = vrot.slane %v315, %v327
    %v364 = vunpack.c.l.b16 %v283
    %v365 = vunpack.c.h.b16 %v283
    %v366 = vunpack.c.l.b16 %v284
    %v367 = vunpack.c.l.b16 %v285
    %v368 = vunpack.c.h.b16 %v285
    %v369 = vunpack.c.l.b16 %v286
    %v370 = vunpack.c.l.b16 %v287
    %v371 = vunpack.c.h.b16 %v287
    %v372 = vunpack.c.l.b16 %v288
    %v373 = vunpack.c.l.b16 %v289
    %v374 = vunpack.c.h.b16 %v289
    %v375 = vunpack.c.l.b16 %v290
    %v376 = vunpack.c.l.b16 %v291
    %v377 = vunpack.c.h.b16 %v291
    %v378 = vunpack.c.l.b16 %v292
    %v379 = vunpack.c.l.b16 %v293
    %v380 = vunpack.c.h.b16 %v293
    %v381 = vunpack.c.l.b16 %v294
    %v382 = vunpack.c.l.b16 %v295
    %v383 = vunpack.c.h.b16 %v295
    %v384 = vunpack.c.l.b16 %v296
    %v385 = vunpack.c.l.b16 %v297
    %v386 = vunpack.c.h.b16 %v297
    %v387 = vunpack.c.l.b16 %v298
    %v388 = vunpack.c.l.b16 %v299
    %v389 = vunpack.c.h.b16 %v299
    %v390 = vunpack.c.l.b16 %v300
    %v391 = vunpack.c.l.b16 %v301
    %v392 = vunpack.c.h.b16 %v301
    %v393 = vunpack.c.l.b16 %v302
    %v394 = vunpack.c.l.b16 %v303
    %v395 = vunpack.c.h.b16 %v303
    %v396 = vunpack.c.l.b16 %v304
    %v397 = vunpack.c.l.b16 %v305
    %v398 = vunpack.c.h.b16 %v305
    %v399 = vunpack.c.l.b16 %v306
    %v400 = vunpack.c.l.b16 %v307
    %v401 = vunpack.c.h.b16 %v307
    %v402 = vunpack.c.l.b16 %v308
    %v403 = vunpack.c.l.b16 %v309
    %v404 = vunpack.c.h.b16 %v309
    %v405 = vunpack.c.l.b16 %v310
    %v406 = vunpack.c.l.b16 %v311
    %v407 = vunpack.c.h.b16 %v311
    %v408 = vunpack.c.l.b16 %v312
    %v409 = vunpack.c.l.b16 %v313
    %v410 = vunpack.c.h.b16 %v313
    %v411 = vunpack.c.l.b16 %v314
    %v412 = vpack.c.b16 %v367, %v364
    %v413 = vpack.c.b16 %v368, %v365
    %v414 = vpack.c.b16 %v369, %v366
    %v415 = vpack.c.b16 %v373, %v370
    %v416 = vpack.c.b16 %v374, %v371
    %v417 = vpack.c.b16 %v375, %v372
    %v418 = vpack.c.b16 %v379, %v376
    %v419 = vpack.c.b16 %v380, %v377
    %v420 = vpack.c.b16 %v381, %v378
    %v421 = vpack.c.b16 %v385, %v382
    %v422 = vpack.c.b16 %v386, %v383
    %v423 = vpack.c.b16 %v387, %v384
    %v424 = vpack.c.b16 %v391, %v388
    %v425 = vpack.c.b16 %v392, %v389
    %v426 = vpack.c.b16 %v393, %v390
    %v427 = vpack.c.b16 %v397, %v394
    %v428 = vpack.c.b16 %v398, %v395
    %v429 = vpack.c.b16 %v399, %v396
    %v430 = vpack.c.b16 %v403, %v400
    %v431 = vpack.c.b16 %v404, %v401
    %v432 = vpack.c.b16 %v405, %v402
    %v433 = vpack.c.b16 %v409, %v406
    %v434 = vpack.c.b16 %v410, %v407
    %v435 = vpack.c.b16 %v411, %v408
    %460 = vmatprep.subr.bf16.mxu0 %v413
    %461 = vmatpush1.bf16.msra.mxu0 %v412
    %462 = vmatprep.subr.bf16.mxu0 %v416
    %463 = vmatpush1.bf16.msra.mxu0 %v415
    %464 = vmatprep.subr.bf16.mxu0 %v419
    %465 = vmatpush1.bf16.msra.mxu0 %v418
    %466 = vmatprep.subr.bf16.mxu0 %v422
    %467 = vmatpush1.bf16.msra.mxu0 %v421
    %468 = vmatprep.subr.bf16.mxu0 %v425
    %469 = vmatpush1.bf16.msra.mxu0 %v424
    %470 = vmatprep.subr.bf16.mxu0 %v428
    %471 = vmatpush1.bf16.msra.mxu0 %v427
    %472 = vmatprep.subr.bf16.mxu0 %v431
    %473 = vmatpush1.bf16.msra.mxu0 %v430
    %474 = vmatprep.subr.bf16.mxu0 %v434
    %475 = vmatpush1.bf16.msra.mxu0 %v433
    %476 = vmatprep.subr.bf16.mxu0 0
    %477 = vmatpush1.bf16.msra.mxu0 0
    %478 = vmatprep.subr.bf16.mxu0 0
    %479 = vmatpush1.bf16.msra.mxu0 0
    %480 = vmatprep.subr.bf16.mxu0 0
    %481 = vmatpush1.bf16.msra.mxu0 0
    %482 = vmatprep.subr.bf16.mxu0 0
    %483 = vmatpush1.bf16.msra.mxu0 0
    %484 = vmatprep.subr.bf16.mxu0 0
    %485 = vmatpush1.bf16.msra.mxu0 0
    %486 = vmatprep.subr.bf16.mxu0 0
    %487 = vmatpush1.bf16.msra.mxu0 0
    %488 = vmatprep.subr.bf16.mxu0 0
    %489 = vmatpush1.bf16.msra.mxu0 0
    %490 = vmatprep.subr.bf16.mxu0 0
    %491 = vmatpush1.bf16.msra.mxu0 0
    %492 = vmatprep.mubr.bf16.mxu0 0
    %493 = vmatmul.mubr.bf16.gmra.mrb[0].mxu0 %v281
    %v494 = vpop.f32.mrb[0].mxu0
    %v495 = vadd.f32 %v320, %v494
    %v496 = vpop.f32.mrb[0].mxu0
    %v497 = vadd.f32 %v324, %v496
    %v498 = vpop.f32.mrb[0].mxu0
    %v499 = vadd.f32 %v320, %v498
    %v500 = vpop.f32.mrb[0].mxu0
    %v501 = vadd.f32 %v324, %v500
    %502 = vmatprep.mubr.bf16.mxu0 0
    %503 = vmatmul.mubr.bf16.gmra.mrb[0].mxu0 %v282
    %v504 = vpop.f32.mrb[0].mxu0
    %v505 = vadd.f32 %v320, %v504
    %v506 = vpop.f32.mrb[0].mxu0
    %v507 = vadd.f32 %v324, %v506
    %v508 = vpop.f32.mrb[0].mxu0
    %v509 = vadd.f32 %v320, %v508
    %v510 = vpop.f32.mrb[0].mxu0
    %v511 = vadd.f32 %v324, %v510
    %512 = vdwg.mxu0
    %513 = vmatprep.subr.bf16.mxu0 0
    %514 = vmatpush1.bf16.msra.mxu0 %v414
    %515 = vmatprep.subr.bf16.mxu0 0
    %516 = vmatpush1.bf16.msra.mxu0 %v417
    %517 = vmatprep.subr.bf16.mxu0 0
    %518 = vmatpush1.bf16.msra.mxu0 %v420
    %519 = vmatprep.subr.bf16.mxu0 0
    %520 = vmatpush1.bf16.msra.mxu0 %v423
    %521 = vmatprep.subr.bf16.mxu0 0
    %522 = vmatpush1.bf16.msra.mxu0 %v426
    %523 = vmatprep.subr.bf16.mxu0 0
    %524 = vmatpush1.bf16.msra.mxu0 %v429
    %525 = vmatprep.subr.bf16.mxu0 0
    %526 = vmatpush1.bf16.msra.mxu0 %v432
    %527 = vmatprep.subr.bf16.mxu0 0
    %528 = vmatpush1.bf16.msra.mxu0 %v435
    %529 = vmatprep.subr.bf16.mxu0 0
    %530 = vmatpush1.bf16.msra.mxu0 0
    %531 = vmatprep.subr.bf16.mxu0 0
    %532 = vmatpush1.bf16.msra.mxu0 0
    %533 = vmatprep.subr.bf16.mxu0 0
    %534 = vmatpush1.bf16.msra.mxu0 0
    %535 = vmatprep.subr.bf16.mxu0 0
    %536 = vmatpush1.bf16.msra.mxu0 0
    %537 = vmatprep.subr.bf16.mxu0 0
    %538 = vmatpush1.bf16.msra.mxu0 0
    %539 = vmatprep.subr.bf16.mxu0 0
    %540 = vmatpush1.bf16.msra.mxu0 0
    %541 = vmatprep.subr.bf16.mxu0 0
    %542 = vmatpush1.bf16.msra.mxu0 0
    %543 = vmatprep.subr.bf16.mxu0 0
    %544 = vmatpush1.bf16.msra.mxu0 0
    %545 = vmatprep.mubr.bf16.mxu0 0
    %546 = vmatmul.mubr.bf16.gmra.mrb[0].mxu0 %v281
    %v547 = vpop.f32.mrb[0].mxu0
    %v548 = vadd.f32 %v328, %v547
    %v549 = vpop.f32.mrb[0].mxu0
    %v550 = vpop.f32.mrb[0].mxu0
    %v551 = vadd.f32 %v328, %v550
    %v552 = vpop.f32.mrb[0].mxu0
    %553 = vmatprep.mubr.bf16.mxu0 0
    %554 = vmatmul.mubr.bf16.gmra.mrb[0].mxu0 %v282
    %v555 = vpop.f32.mrb[0].mxu0
    %v556 = vadd.f32 %v328, %v555
    %v557 = vpop.f32.mrb[0].mxu0
    %v558 = vpop.f32.mrb[0].mxu0
    %v559 = vadd.f32 %v328, %v558
    %v560 = vpop.f32.mrb[0].mxu0
    %561 = vdwg.mxu0
    %v562 = vmul.f32 %v495, %v497
    %v563 = vmul.f32 %v495, %v501
    %v564 = vmul.f32 %v495, %v507
    %v565 = vmul.f32 %v495, %v511
    %v566 = vmul.f32 %v499, %v497
    %v567 = vmul.f32 %v499, %v501
    %v568 = vmul.f32 %v499, %v507
    %v569 = vmul.f32 %v499, %v511
    %v570 = vmul.f32 %v505, %v497
    %v571 = vmul.f32 %v505, %v501
    %v572 = vmul.f32 %v505, %v507
    %v573 = vmul.f32 %v505, %v511
    %v574 = vmul.f32 %v509, %v497
    %v575 = vmul.f32 %v509, %v501
    %v576 = vmul.f32 %v509, %v507
    %v577 = vmul.f32 %v509, %v511
    %v578 = vld [vmem:[#allocation8] sm:$0xff]
    %v579 = vld [vmem:[#allocation8 + $0x8] sm:$0xff]
    %v580 = vld [vmem:[#allocation8 + $0x10] sm:$0xff]
    %v581 = vld [vmem:[#allocation8 + $0x18] sm:$0xff]
    %v582 = vld [vmem:[#allocation8 + $0x20] sm:$0xff]
    %v583 = vld [vmem:[#allocation8 + $0x28] sm:$0xff]
    %v584 = vld [vmem:[#allocation8 + $0x30] sm:$0xff]
    %v585 = vld [vmem:[#allocation8 + $0x38] sm:$0xff]
    %v586 = vld [vmem:[#allocation8 + $0x40] sm:$0xff]
    %v587 = vld [vmem:[#allocation8 + $0x48] sm:$0xff]
    %v588 = vld [vmem:[#allocation8 + $0x50] sm:$0xff]
    %v589 = vld [vmem:[#allocation8 + $0x58] sm:$0xff]
    %v590 = vld [vmem:[#allocation8 + $0x60] sm:$0xff]
    %v591 = vld [vmem:[#allocation8 + $0x68] sm:$0xff]
    %v592 = vld [vmem:[#allocation8 + $0x70] sm:$0xff]
    %v593 = vld [vmem:[#allocation8 + $0x78] sm:$0xff]
    %594 = vmatprep.subr.mxu0 0.0
    %595 = vmatpush1.msra.mxu0 %v578
    %596 = vmatprep.subr.mxu0 0.0
    %597 = vmatpush1.msra.mxu0 %v579
    %598 = vmatprep.subr.mxu0 0.0
    %599 = vmatpush1.msra.mxu0 %v580
    %600 = vmatprep.subr.mxu0 0.0
    %601 = vmatpush1.msra.mxu0 %v581
    %602 = vmatprep.subr.mxu0 0.0
    %603 = vmatpush1.msra.mxu0 %v582
    %604 = vmatprep.subr.mxu0 0.0
    %605 = vmatpush1.msra.mxu0 %v583
    %606 = vmatprep.subr.mxu0 0.0
    %607 = vmatpush1.msra.mxu0 %v584
    %608 = vmatprep.subr.mxu0 0.0
    %609 = vmatpush1.msra.mxu0 %v585
    %610 = vmatprep.subr.mxu0 0.0
    %611 = vmatpush1.msra.mxu0 %v586
    %612 = vmatprep.subr.mxu0 0.0
    %613 = vmatpush1.msra.mxu0 %v587
    %614 = vmatprep.subr.mxu0 0.0
    %615 = vmatpush1.msra.mxu0 %v588
    %616 = vmatprep.subr.mxu0 0.0
    %617 = vmatpush1.msra.mxu0 %v589
    %618 = vmatprep.subr.mxu0 0.0
    %619 = vmatpush1.msra.mxu0 %v590
    %620 = vmatprep.subr.mxu0 0.0
    %621 = vmatpush1.msra.mxu0 %v591
    %622 = vmatprep.subr.mxu0 0.0
    %623 = vmatpush1.msra.mxu0 %v592
    %624 = vmatprep.subr.mxu0 0.0
    %625 = vmatpush1.msra.mxu0 %v593
    %626 = vmatprep.subr.mxu0 0.0
    %627 = vmatpush1.msra.mxu0 0.0
    %628 = vmatprep.subr.mxu0 0.0
    %629 = vmatpush1.msra.mxu0 0.0
    %630 = vmatprep.subr.mxu0 0.0
    %631 = vmatpush1.msra.mxu0 0.0
    %632 = vmatprep.subr.mxu0 0.0
    %633 = vmatpush1.msra.mxu0 0.0
    %634 = vmatprep.subr.mxu0 0.0
    %635 = vmatpush1.msra.mxu0 0.0
    %636 = vmatprep.subr.mxu0 0.0
    %637 = vmatpush1.msra.mxu0 0.0
    %638 = vmatprep.subr.mxu0 0.0
    %639 = vmatpush1.msra.mxu0 0.0
    %640 = vmatprep.subr.mxu0 0.0
    %641 = vmatpush1.msra.mxu0 0.0
    %642 = vmatprep.subr.mxu0 0.0
    %643 = vmatpush1.msra.mxu0 0.0
    %644 = vmatprep.subr.mxu0 0.0
    %645 = vmatpush1.msra.mxu0 0.0
    %646 = vmatprep.subr.mxu0 0.0
    %647 = vmatpush1.msra.mxu0 0.0
    %648 = vmatprep.subr.mxu0 0.0
    %649 = vmatpush1.msra.mxu0 0.0
    %650 = vmatprep.subr.mxu0 0.0
    %651 = vmatpush1.msra.mxu0 0.0
    %652 = vmatprep.subr.mxu0 0.0
    %653 = vmatpush1.msra.mxu0 0.0
    %654 = vmatprep.subr.mxu0 0.0
    %655 = vmatpush1.msra.mxu0 0.0
    %656 = vmatprep.subr.mxu0 0.0
    %657 = vmatpush1.msra.mxu0 0.0
    %658 = vmatprep.mubr.f32.mxu0 0.0
    %659 = vmatmul.mubr.f32.gmra.mrb[0].mxu0 %v562
    %v660 = vpop.f32.mrb[0].mxu0
    %v661 = vadd.f32 0.0, %v660
    %v662 = vpop.f32.mrb[0].mxu0
    %663 = vmatprep.mubr.f32.mxu0 0.0
    %664 = vmatmul.mubr.f32.gmra.mrb[0].mxu0 %v563
    %v665 = vpop.f32.mrb[0].mxu0
    %v666 = vadd.f32 0.0, %v665
    %v667 = vpop.f32.mrb[0].mxu0
    %668 = vmatprep.mubr.f32.mxu0 0.0
    %669 = vmatmul.mubr.f32.gmra.mrb[0].mxu0 %v564
    %v670 = vpop.f32.mrb[0].mxu0
    %v671 = vadd.f32 0.0, %v670
    %v672 = vpop.f32.mrb[0].mxu0
    %673 = vmatprep.mubr.f32.mxu0 0.0
    %674 = vmatmul.mubr.f32.gmra.mrb[0].mxu0 %v565
    %v675 = vpop.f32.mrb[0].mxu0
    %v676 = vadd.f32 0.0, %v675
    %v677 = vpop.f32.mrb[0].mxu0
    %678 = vmatprep.mubr.f32.mxu0 0.0
    %679 = vmatmul.mubr.f32.gmra.mrb[0].mxu0 %v566
    %v680 = vpop.f32.mrb[0].mxu0
    %v681 = vadd.f32 0.0, %v680
    %v682 = vpop.f32.mrb[0].mxu0
    %683 = vmatprep.mubr.f32.mxu0 0.0
    %684 = vmatmul.mubr.f32.gmra.mrb[0].mxu0 %v567
    %v685 = vpop.f32.mrb[0].mxu0
    %v686 = vadd.f32 0.0, %v685
    %v687 = vpop.f32.mrb[0].mxu0
    %688 = vmatprep.mubr.f32.mxu0 0.0
    %689 = vmatmul.mubr.f32.gmra.mrb[0].mxu0 %v568
    %v690 = vpop.f32.mrb[0].mxu0
    %v691 = vadd.f32 0.0, %v690
    %v692 = vpop.f32.mrb[0].mxu0
    %693 = vmatprep.mubr.f32.mxu0 0.0
    %694 = vmatmul.mubr.f32.gmra.mrb[0].mxu0 %v569
    %v695 = vpop.f32.mrb[0].mxu0
    %v696 = vadd.f32 0.0, %v695
    %v697 = vpop.f32.mrb[0].mxu0
    %698 = vmatprep.mubr.f32.mxu0 0.0
    %699 = vmatmul.mubr.f32.gmra.mrb[0].mxu0 %v570
    %v700 = vpop.f32.mrb[0].mxu0
    %v701 = vadd.f32 0.0, %v700
    %v702 = vpop.f32.mrb[0].mxu0
    %703 = vmatprep.mubr.f32.mxu0 0.0
    %704 = vmatmul.mubr.f32.gmra.mrb[0].mxu0 %v571
    %v705 = vpop.f32.mrb[0].mxu0
    %v706 = vadd.f32 0.0, %v705
    %v707 = vpop.f32.mrb[0].mxu0
    %708 = vmatprep.mubr.f32.mxu0 0.0
    %709 = vmatmul.mubr.f32.gmra.mrb[0].mxu0 %v572
    %v710 = vpop.f32.mrb[0].mxu0
    %v711 = vadd.f32 0.0, %v710
    %v712 = vpop.f32.mrb[0].mxu0
    %713 = vmatprep.mubr.f32.mxu0 0.0
    %714 = vmatmul.mubr.f32.gmra.mrb[0].mxu0 %v573
    %v715 = vpop.f32.mrb[0].mxu0
    %v716 = vadd.f32 0.0, %v715
    %v717 = vpop.f32.mrb[0].mxu0
    %718 = vmatprep.mubr.f32.mxu0 0.0
    %719 = vmatmul.mubr.f32.gmra.mrb[0].mxu0 %v574
    %v720 = vpop.f32.mrb[0].mxu0
    %v721 = vadd.f32 0.0, %v720
    %v722 = vpop.f32.mrb[0].mxu0
    %723 = vmatprep.mubr.f32.mxu0 0.0
    %724 = vmatmul.mubr.f32.gmra.mrb[0].mxu0 %v575
    %v725 = vpop.f32.mrb[0].mxu0
    %v726 = vadd.f32 0.0, %v725
    %v727 = vpop.f32.mrb[0].mxu0
    %728 = vmatprep.mubr.f32.mxu0 0.0
    %729 = vmatmul.mubr.f32.gmra.mrb[0].mxu0 %v576
    %v730 = vpop.f32.mrb[0].mxu0
    %v731 = vadd.f32 0.0, %v730
    %v732 = vpop.f32.mrb[0].mxu0
    %733 = vmatprep.mubr.f32.mxu0 0.0
    %734 = vmatmul.mubr.f32.gmra.mrb[0].mxu0 %v577
    %v735 = vpop.f32.mrb[0].mxu0
    %v736 = vadd.f32 0.0, %v735
    %v737 = vpop.f32.mrb[0].mxu0
    %738 = vdwg.mxu0
    %v739 = vmax.f32 %v661, %v666
    %v740 = vmax.f32 %v739, %v671
    %v741 = vmax.f32 %v740, %v676
    %v742 = vmax.f32 %v681, %v686
    %v743 = vmax.f32 %v742, %v691
    %v744 = vmax.f32 %v743, %v696
    %v745 = vmax.f32 %v701, %v706
    %v746 = vmax.f32 %v745, %v711
    %v747 = vmax.f32 %v746, %v716
    %v748 = vmax.f32 %v721, %v726
    %v749 = vmax.f32 %v748, %v731
    %v750 = vmax.f32 %v749, %v736
    %v751 = vsub.f32 %v661, %v741
    %v752 = vsub.f32 %v666, %v741
    %v753 = vsub.f32 %v671, %v741
    %v754 = vsub.f32 %v676, %v741
    %v755 = vsub.f32 %v681, %v744
    %v756 = vsub.f32 %v686, %v744
    %v757 = vsub.f32 %v691, %v744
    %v758 = vsub.f32 %v696, %v744
    %v759 = vsub.f32 %v701, %v747
    %v760 = vsub.f32 %v706, %v747
    %v761 = vsub.f32 %v711, %v747
    %v762 = vsub.f32 %v716, %v747
    %v763 = vsub.f32 %v721, %v750
    %v764 = vsub.f32 %v726, %v750
    %v765 = vsub.f32 %v731, %v750
    %v766 = vsub.f32 %v736, %v750
    %v767 = vmul.f32 %v751, 1.442695
    %v768 = vpow.pop %v767
    %v769 = vmul.f32 %v752, 1.442695
    %v770 = vpow.pop %v769
    %v771 = vmul.f32 %v753, 1.442695
    %v772 = vpow.pop %v771
    %v773 = vmul.f32 %v754, 1.442695
    %v774 = vpow.pop %v773
    %v775 = vmul.f32 %v755, 1.442695
    %v776 = vpow.pop %v775
    %v777 = vmul.f32 %v756, 1.442695
    %v778 = vpow.pop %v777
    %v779 = vmul.f32 %v757, 1.442695
    %v780 = vpow.pop %v779
    %v781 = vmul.f32 %v758, 1.442695
    %v782 = vpow.pop %v781
    %v783 = vmul.f32 %v759, 1.442695
    %v784 = vpow.pop %v783
    %v785 = vmul.f32 %v760, 1.442695
    %v786 = vpow.pop %v785
    %v787 = vmul.f32 %v761, 1.442695
    %v788 = vpow.pop %v787
    %v789 = vmul.f32 %v762, 1.442695
    %v790 = vpow.pop %v789
    %v791 = vmul.f32 %v763, 1.442695
    %v792 = vpow.pop %v791
    %v793 = vmul.f32 %v764, 1.442695
    %v794 = vpow.pop %v793
    %v795 = vmul.f32 %v765, 1.442695
    %v796 = vpow.pop %v795
    %v797 = vmul.f32 %v766, 1.442695
    %v798 = vpow.pop %v797
    %v799 = vadd.f32 %v768, %v770
    %v800 = vadd.f32 %v799, %v772
    %v801 = vadd.f32 %v800, %v774
    %v802 = vadd.f32 %v776, %v778
    %v803 = vadd.f32 %v802, %v780
    %v804 = vadd.f32 %v803, %v782
    %v805 = vadd.f32 %v784, %v786
    %v806 = vadd.f32 %v805, %v788
    %v807 = vadd.f32 %v806, %v790
    %v808 = vadd.f32 %v792, %v794
    %v809 = vadd.f32 %v808, %v796
    %v810 = vadd.f32 %v809, %v798
    %v811 = vrcp.pop %v801
    %v812 = vrcp.pop %v804
    %v813 = vrcp.pop %v807
    %v814 = vrcp.pop %v810
    %v815 = vmul.f32 %v768, %v811
    %v816 = vmul.f32 %v770, %v811
    %v817 = vmul.f32 %v772, %v811
    %v818 = vmul.f32 %v774, %v811
    %v819 = vmul.f32 %v776, %v812
    %v820 = vmul.f32 %v778, %v812
    %v821 = vmul.f32 %v780, %v812
    %v822 = vmul.f32 %v782, %v812
    %v823 = vmul.f32 %v784, %v813
    %v824 = vmul.f32 %v786, %v813
    %v825 = vmul.f32 %v788, %v813
    %v826 = vmul.f32 %v790, %v813
    %v827 = vmul.f32 %v792, %v814
    %v828 = vmul.f32 %v794, %v814
    %v829 = vmul.f32 %v796, %v814
    %v830 = vmul.f32 %v798, %v814
    %v831 = vmul.f32 %v815, %v548
    %v832 = vmul.f32 %v816, %v551
    %v833 = vmul.f32 %v817, %v556
    %v834 = vmul.f32 %v818, %v559
    %v835 = vmul.f32 %v819, %v548
    %v836 = vmul.f32 %v820, %v551
    %v837 = vmul.f32 %v821, %v556
    %v838 = vmul.f32 %v822, %v559
    %v839 = vmul.f32 %v823, %v548
    %v840 = vmul.f32 %v824, %v551
    %v841 = vmul.f32 %v825, %v556
    %v842 = vmul.f32 %v826, %v559
    %v843 = vmul.f32 %v827, %v548
    %v844 = vmul.f32 %v828, %v551
    %v845 = vmul.f32 %v829, %v556
    %v846 = vmul.f32 %v830, %v559
    %v847 = vadd.f32 %v831, %v832
    %v848 = vadd.f32 %v847, %v833
    %v849 = vadd.f32 %v848, %v834
    %v850 = vadd.f32 %v835, %v836
    %v851 = vadd.f32 %v850, %v837
    %v852 = vadd.f32 %v851, %v838
    %v853 = vadd.f32 %v839, %v840
    %v854 = vadd.f32 %v853, %v841
    %v855 = vadd.f32 %v854, %v842
    %v856 = vadd.f32 %v843, %v844
    %v857 = vadd.f32 %v856, %v845
    %v858 = vadd.f32 %v857, %v846
    %v859 = vpack.c.bf16 %v852, %v849
    %v860 = vpack.c.bf16 %v858, %v855
    %v861 = vld [vmem:[#allocation10] sm:$0xf]
    %v862 = vld [vmem:[#allocation10 + $0x4] sm:$0xf]
    %v863 = vld [vmem:[#allocation10 + $0x8] sm:$0xf]
    %v864 = vld [vmem:[#allocation10 + $0xc] sm:$0xf]
    %v865 = vld [vmem:[#allocation10 + $0x10] sm:$0xf]
    %v866 = vld [vmem:[#allocation10 + $0x14] sm:$0xf]
    %v867 = vld [vmem:[#allocation10 + $0x18] sm:$0xf]
    %v868 = vld [vmem:[#allocation10 + $0x1c] sm:$0xf]
    %v869 = vld [vmem:[#allocation10 + $0x20] sm:$0xf]
    %v870 = vld [vmem:[#allocation10 + $0x24] sm:$0xf]
    %v871 = vld [vmem:[#allocation10 + $0x28] sm:$0xf]
    %v872 = vld [vmem:[#allocation10 + $0x2c] sm:$0xf]
    %v873 = vld [vmem:[#allocation10 + $0x30] sm:$0xf]
    %v874 = vld [vmem:[#allocation10 + $0x34] sm:$0xf]
    %v875 = vld [vmem:[#allocation10 + $0x38] sm:$0xf]
    %v876 = vld [vmem:[#allocation10 + $0x3c] sm:$0xf]
    %v877 = vld [vmem:[%s7] sm:$0x1]
    %v879 = vlaneseq
    %v880 = vshrl.u32 %v879, 7
    %v881 = vsub.s32 0, %v880
    %v882 = vrot.slane %v877, %v881
    %v900 = vunpack.c.l.b16 %v861
    %v901 = vunpack.c.l.b16 %v862
    %v902 = vunpack.c.l.b16 %v863
    %v903 = vunpack.c.l.b16 %v864
    %v904 = vunpack.c.l.b16 %v865
    %v905 = vunpack.c.l.b16 %v866
    %v906 = vunpack.c.l.b16 %v867
    %v907 = vunpack.c.l.b16 %v868
    %v908 = vunpack.c.l.b16 %v869
    %v909 = vunpack.c.l.b16 %v870
    %v910 = vunpack.c.l.b16 %v871
    %v911 = vunpack.c.l.b16 %v872
    %v912 = vunpack.c.l.b16 %v873
    %v913 = vunpack.c.l.b16 %v874
    %v914 = vunpack.c.l.b16 %v875
    %v915 = vunpack.c.l.b16 %v876
    %v916 = vpack.c.b16 %v901, %v900
    %v917 = vpack.c.b16 %v903, %v902
    %v918 = vpack.c.b16 %v905, %v904
    %v919 = vpack.c.b16 %v907, %v906
    %v920 = vpack.c.b16 %v909, %v908
    %v921 = vpack.c.b16 %v911, %v910
    %v922 = vpack.c.b16 %v913, %v912
    %v923 = vpack.c.b16 %v915, %v914
    %932 = vmatprep.subr.bf16.mxu0 0
    %933 = vmatpush1.bf16.msra.mxu0 %v916
    %934 = vmatprep.subr.bf16.mxu0 0
    %935 = vmatpush1.bf16.msra.mxu0 %v917
    %936 = vmatprep.subr.bf16.mxu0 0
    %937 = vmatpush1.bf16.msra.mxu0 %v918
    %938 = vmatprep.subr.bf16.mxu0 0
    %939 = vmatpush1.bf16.msra.mxu0 %v919
    %940 = vmatprep.subr.bf16.mxu0 0
    %941 = vmatpush1.bf16.msra.mxu0 %v920
    %942 = vmatprep.subr.bf16.mxu0 0
    %943 = vmatpush1.bf16.msra.mxu0 %v921
    %944 = vmatprep.subr.bf16.mxu0 0
    %945 = vmatpush1.bf16.msra.mxu0 %v922
    %946 = vmatprep.subr.bf16.mxu0 0
    %947 = vmatpush1.bf16.msra.mxu0 %v923
    %948 = vmatprep.subr.bf16.mxu0 0
    %949 = vmatpush1.bf16.msra.mxu0 0
    %950 = vmatprep.subr.bf16.mxu0 0
    %951 = vmatpush1.bf16.msra.mxu0 0
    %952 = vmatprep.subr.bf16.mxu0 0
    %953 = vmatpush1.bf16.msra.mxu0 0
    %954 = vmatprep.subr.bf16.mxu0 0
    %955 = vmatpush1.bf16.msra.mxu0 0
    %956 = vmatprep.subr.bf16.mxu0 0
    %957 = vmatpush1.bf16.msra.mxu0 0
    %958 = vmatprep.subr.bf16.mxu0 0
    %959 = vmatpush1.bf16.msra.mxu0 0
    %960 = vmatprep.subr.bf16.mxu0 0
    %961 = vmatpush1.bf16.msra.mxu0 0
    %962 = vmatprep.subr.bf16.mxu0 0
    %963 = vmatpush1.bf16.msra.mxu0 0
    %964 = vmatprep.mubr.bf16.mxu0 0
    %965 = vmatmul.mubr.bf16.gmra.mrb[0].mxu0 %v859
    %v966 = vpop.f32.mrb[0].mxu0
    %v967 = vadd.f32 %v882, %v966
    %v968 = vpop.f32.mrb[0].mxu0
    %v969 = vpop.f32.mrb[0].mxu0
    %v970 = vadd.f32 %v882, %v969
    %v971 = vpop.f32.mrb[0].mxu0
    %972 = vmatprep.mubr.bf16.mxu0 0
    %973 = vmatmul.mubr.bf16.gmra.mrb[0].mxu0 %v860
    %v974 = vpop.f32.mrb[0].mxu0
    %v975 = vadd.f32 %v882, %v974
    %v976 = vpop.f32.mrb[0].mxu0
    %v977 = vpop.f32.mrb[0].mxu0
    %v978 = vadd.f32 %v882, %v977
    %v979 = vpop.f32.mrb[0].mxu0
    %980 = vdwg.mxu0
    %v981 = vadd.f32 %v967, %v165
    %v982 = vadd.f32 %v970, %v166
    %v983 = vadd.f32 %v975, %v167
    %v984 = vadd.f32 %v978, %v168
    %v985 = vld [vmem:[%s8] sm:$0xff]
    %v986 = vld [vmem:[#allocation11] sm:$0xff]
    %987 = vadd.xlane.f32.xlu0 %v981
    %v988 = vpop.xlane.xlu0 %987
    %989 = vadd.xlane.f32.xlu0 %v982
    %v990 = vpop.xlane.xlu0 %989
    %991 = vadd.xlane.f32.xlu0 %v983
    %v992 = vpop.xlane.xlu0 %991
    %993 = vadd.xlane.f32.xlu0 %v984
    %v994 = vpop.xlane.xlu0 %993
    %v995 = vmul.f32 %v988, %v179
    %v996 = vmul.f32 %v990, %v179
    %v997 = vmul.f32 %v992, %v179
    %v998 = vmul.f32 %v994, %v179
    %v999 = vrot.slane %v995, 4
    %v1000 = vadd.f32 %v995, %v999
    %v1001 = vrot.slane %v1000, 2
    %v1002 = vadd.f32 %v1000, %v1001
    %v1003 = vrot.slane %v1002, 1
    %v1004 = vadd.f32 %v1002, %v1003
    %v1005 = vrot.slane %v996, 4
    %v1006 = vadd.f32 %v996, %v1005
    %v1007 = vrot.slane %v1006, 2
    %v1008 = vadd.f32 %v1006, %v1007
    %v1009 = vrot.slane %v1008, 1
    %v1010 = vadd.f32 %v1008, %v1009
    %v1011 = vrot.slane %v997, 4
    %v1012 = vadd.f32 %v997, %v1011
    %v1013 = vrot.slane %v1012, 2
    %v1014 = vadd.f32 %v1012, %v1013
    %v1015 = vrot.slane %v1014, 1
    %v1016 = vadd.f32 %v1014, %v1015
    %v1017 = vrot.slane %v998, 4
    %v1018 = vadd.f32 %v998, %v1017
    %v1019 = vrot.slane %v1018, 2
    %v1020 = vadd.f32 %v1018, %v1019
    %v1021 = vrot.slane %v1020, 1
    %v1022 = vadd.f32 %v1020, %v1021
    %v1023 = vmul.f32 %v1004, %v208
    %v1024 = vmul.f32 %v1010, %v208
    %v1025 = vmul.f32 %v1016, %v208
    %v1026 = vmul.f32 %v1022, %v208
    %v1027 = vsub.f32 %v981, %v1023
    %v1028 = vsub.f32 %v982, %v1024
    %v1029 = vsub.f32 %v983, %v1025
    %v1030 = vsub.f32 %v984, %v1026
    %v1031 = vmul.f32 %v1027, %v1027
    %v1032 = vmul.f32 %v1028, %v1028
    %v1033 = vmul.f32 %v1029, %v1029
    %v1034 = vmul.f32 %v1030, %v1030
    %1035 = vadd.xlane.f32.xlu0 %v1031
    %v1036 = vpop.xlane.xlu0 %1035
    %1037 = vadd.xlane.f32.xlu0 %v1032
    %v1038 = vpop.xlane.xlu0 %1037
    %1039 = vadd.xlane.f32.xlu0 %v1033
    %v1040 = vpop.xlane.xlu0 %1039
    %1041 = vadd.xlane.f32.xlu0 %v1034
    %v1042 = vpop.xlane.xlu0 %1041
    %v1043 = vmul.f32 %v1036, %v179
    %v1044 = vmul.f32 %v1038, %v179
    %v1045 = vmul.f32 %v1040, %v179
    %v1046 = vmul.f32 %v1042, %v179
    %v1047 = vrot.slane %v1043, 4
    %v1048 = vadd.f32 %v1043, %v1047
    %v1049 = vrot.slane %v1048, 2
    %v1050 = vadd.f32 %v1048, %v1049
    %v1051 = vrot.slane %v1050, 1
    %v1052 = vadd.f32 %v1050, %v1051
    %v1053 = vrot.slane %v1044, 4
    %v1054 = vadd.f32 %v1044, %v1053
    %v1055 = vrot.slane %v1054, 2
    %v1056 = vadd.f32 %v1054, %v1055
    %v1057 = vrot.slane %v1056, 1
    %v1058 = vadd.f32 %v1056, %v1057
    %v1059 = vrot.slane %v1045, 4
    %v1060 = vadd.f32 %v1045, %v1059
    %v1061 = vrot.slane %v1060, 2
    %v1062 = vadd.f32 %v1060, %v1061
    %v1063 = vrot.slane %v1062, 1
    %v1064 = vadd.f32 %v1062, %v1063
    %v1065 = vrot.slane %v1046, 4
    %v1066 = vadd.f32 %v1046, %v1065
    %v1067 = vrot.slane %v1066, 2
    %v1068 = vadd.f32 %v1066, %v1067
    %v1069 = vrot.slane %v1068, 1
    %v1070 = vadd.f32 %v1068, %v1069
    %v1071 = vmul.f32 %v1052, %v208
    %v1072 = vmul.f32 %v1058, %v208
    %v1073 = vmul.f32 %v1064, %v208
    %v1074 = vmul.f32 %v1070, %v208
    %v1075 = vadd.f32 %v1071, 1e-05
    %v1076 = vadd.f32 %v1072, 1e-05
    %v1077 = vadd.f32 %v1073, 1e-05
    %v1078 = vadd.f32 %v1074, 1e-05
    %v1079 = vrsqrt.pop %v1075
    %v1080 = vrsqrt.pop %v1076
    %v1081 = vrsqrt.pop %v1077
    %v1082 = vrsqrt.pop %v1078
    %v1083 = vmul.f32 %v1027, %v1079
    %v1084 = vmul.f32 %v1028, %v1080
    %v1085 = vmul.f32 %v1029, %v1081
    %v1086 = vmul.f32 %v1030, %v1082
    %v1087 = vmul.f32 %v1083, %v985
    %v1088 = vmul.f32 %v1084, %v985
    %v1089 = vmul.f32 %v1085, %v985
    %v1090 = vmul.f32 %v1086, %v985
    %v1091 = vadd.f32 %v1087, %v986
    %v1092 = vadd.f32 %v1088, %v986
    %v1093 = vadd.f32 %v1089, %v986
    %v1094 = vadd.f32 %v1090, %v986
    %v1095 = vpack.c.bf16 %v1092, %v1091
    %v1096 = vpack.c.bf16 %v1094, %v1093
    %v1097 = vld [vmem:[#allocation13] sm:$0xff]
    %v1098 = vld [vmem:[#allocation13 + $0x8] sm:$0xff]
    %v1099 = vld [vmem:[#allocation13 + $0x10] sm:$0xff]
    %v1100 = vld [vmem:[#allocation13 + $0x18] sm:$0xff]
    %v1101 = vld [vmem:[#allocation13 + $0x20] sm:$0xff]
    %v1102 = vld [vmem:[#allocation13 + $0x28] sm:$0xff]
    %v1103 = vld [vmem:[#allocation13 + $0x30] sm:$0xff]
    %v1104 = vld [vmem:[#allocation13 + $0x38] sm:$0xff]
    %v1105 = vld [vmem:[#allocation13 + $0x40] sm:$0xff]
    %v1106 = vld [vmem:[#allocation13 + $0x48] sm:$0xff]
    %v1107 = vld [vmem:[#allocation13 + $0x50] sm:$0xff]
    %v1108 = vld [vmem:[#allocation13 + $0x58] sm:$0xff]
    %v1109 = vld [vmem:[#allocation13 + $0x60] sm:$0xff]
    %v1110 = vld [vmem:[#allocation13 + $0x68] sm:$0xff]
    %v1111 = vld [vmem:[#allocation13 + $0x70] sm:$0xff]
    %v1112 = vld [vmem:[#allocation13 + $0x78] sm:$0xff]
    %v1113 = vld [vmem:[#allocation13 + $0x80] sm:$0xff]
    %v1114 = vld [vmem:[#allocation13 + $0x88] sm:$0xff]
    %v1115 = vld [vmem:[#allocation13 + $0x90] sm:$0xff]
    %v1116 = vld [vmem:[#allocation13 + $0x98] sm:$0xff]
    %v1117 = vld [vmem:[#allocation13 + $0xa0] sm:$0xff]
    %v1118 = vld [vmem:[#allocation13 + $0xa8] sm:$0xff]
    %v1119 = vld [vmem:[#allocation13 + $0xb0] sm:$0xff]
    %v1120 = vld [vmem:[#allocation13 + $0xb8] sm:$0xff]
    %v1121 = vld [vmem:[#allocation13 + $0xc0] sm:$0xff]
    %v1122 = vld [vmem:[#allocation13 + $0xc8] sm:$0xff]
    %v1123 = vld [vmem:[#allocation13 + $0xd0] sm:$0xff]
    %v1124 = vld [vmem:[#allocation13 + $0xd8] sm:$0xff]
    %v1125 = vld [vmem:[#allocation13 + $0xe0] sm:$0xff]
    %v1126 = vld [vmem:[#allocation13 + $0xe8] sm:$0xff]
    %v1127 = vld [vmem:[#allocation13 + $0xf0] sm:$0xff]
    %v1128 = vld [vmem:[#allocation13 + $0xf8] sm:$0xff]
    %v1129 = vld [vmem:[#allocation14] sm:$0xf]
    %v1131 = vlaneseq
    %v1132 = vshrl.u32 %v1131, 7
    %v1133 = vsub.s32 0, %v1132
    %v1134 = vrot.slane %v1129, %v1133
    %v1135 = vlaneseq
    %v1136 = vshrl.u32 %v1135, 7
    %v1137 = vsub.s32 1, %v1136
    %v1138 = vrot.slane %v1129, %v1137
    %v1139 = vlaneseq
    %v1140 = vshrl.u32 %v1139, 7
    %v1141 = vsub.s32 2, %v1140
    %v1142 = vrot.slane %v1129, %v1141
    %v1143 = vlaneseq
    %v1144 = vshrl.u32 %v1143, 7
    %v1145 = vsub.s32 3, %v1144
    %v1146 = vrot.slane %v1129, %v1145
    %v1183 = vunpack.c.l.b16 %v1097
    %v1184 = vunpack.c.h.b16 %v1097
    %v1185 = vunpack.c.l.b16 %v1098
    %v1186 = vunpack.c.h.b16 %v1098
    %v1187 = vunpack.c.l.b16 %v1099
    %v1188 = vunpack.c.h.b16 %v1099
    %v1189 = vunpack.c.l.b16 %v1100
    %v1190 = vunpack.c.h.b16 %v1100
    %v1191 = vunpack.c.l.b16 %v1101
    %v1192 = vunpack.c.h.b16 %v1101
    %v1193 = vunpack.c.l.b16 %v1102
    %v1194 = vunpack.c.h.b16 %v1102
    %v1195 = vunpack.c.l.b16 %v1103
    %v1196 = vunpack.c.h.b16 %v1103
    %v1197 = vunpack.c.l.b16 %v1104
    %v1198 = vunpack.c.h.b16 %v1104
    %v1199 = vunpack.c.l.b16 %v1105
    %v1200 = vunpack.c.h.b16 %v1105
    %v1201 = vunpack.c.l.b16 %v1106
    %v1202 = vunpack.c.h.b16 %v1106
    %v1203 = vunpack.c.l.b16 %v1107
    %v1204 = vunpack.c.h.b16 %v1107
    %v1205 = vunpack.c.l.b16 %v1108
    %v1206 = vunpack.c.h.b16 %v1108
    %v1207 = vunpack.c.l.b16 %v1109
    %v1208 = vunpack.c.h.b16 %v1109
    %v1209 = vunpack.c.l.b16 %v1110
    %v1210 = vunpack.c.h.b16 %v1110
    %v1211 = vunpack.c.l.b16 %v1111
    %v1212 = vunpack.c.h.b16 %v1111
    %v1213 = vunpack.c.l.b16 %v1112
    %v1214 = vunpack.c.h.b16 %v1112
    %v1215 = vunpack.c.l.b16 %v1113
    %v1216 = vunpack.c.h.b16 %v1113
    %v1217 = vunpack.c.l.b16 %v1114
    %v1218 = vunpack.c.h.b16 %v1114
    %v1219 = vunpack.c.l.b16 %v1115
    %v1220 = vunpack.c.h.b16 %v1115
    %v1221 = vunpack.c.l.b16 %v1116
    %v1222 = vunpack.c.h.b16 %v1116
    %v1223 = vunpack.c.l.b16 %v1117
    %v1224 = vunpack.c.h.b16 %v1117
    %v1225 = vunpack.c.l.b16 %v1118
    %v1226 = vunpack.c.h.b16 %v1118
    %v1227 = vunpack.c.l.b16 %v1119
    %v1228 = vunpack.c.h.b16 %v1119
    %v1229 = vunpack.c.l.b16 %v1120
    %v1230 = vunpack.c.h.b16 %v1120
    %v1231 = vunpack.c.l.b16 %v1121
    %v1232 = vunpack.c.h.b16 %v1121
    %v1233 = vunpack.c.l.b16 %v1122
    %v1234 = vunpack.c.h.b16 %v1122
    %v1235 = vunpack.c.l.b16 %v1123
    %v1236 = vunpack.c.h.b16 %v1123
    %v1237 = vunpack.c.l.b16 %v1124
    %v1238 = vunpack.c.h.b16 %v1124
    %v1239 = vunpack.c.l.b16 %v1125
    %v1240 = vunpack.c.h.b16 %v1125
    %v1241 = vunpack.c.l.b16 %v1126
    %v1242 = vunpack.c.h.b16 %v1126
    %v1243 = vunpack.c.l.b16 %v1127
    %v1244 = vunpack.c.h.b16 %v1127
    %v1245 = vunpack.c.l.b16 %v1128
    %v1246 = vunpack.c.h.b16 %v1128
    %v1247 = vpack.c.b16 %v1187, %v1183
    %v1248 = vpack.c.b16 %v1188, %v1184
    %v1249 = vpack.c.b16 %v1189, %v1185
    %v1250 = vpack.c.b16 %v1190, %v1186
    %v1251 = vpack.c.b16 %v1195, %v1191
    %v1252 = vpack.c.b16 %v1196, %v1192
    %v1253 = vpack.c.b16 %v1197, %v1193
    %v1254 = vpack.c.b16 %v1198, %v1194
    %v1255 = vpack.c.b16 %v1203, %v1199
    %v1256 = vpack.c.b16 %v1204, %v1200
    %v1257 = vpack.c.b16 %v1205, %v1201
    %v1258 = vpack.c.b16 %v1206, %v1202
    %v1259 = vpack.c.b16 %v1211, %v1207
    %v1260 = vpack.c.b16 %v1212, %v1208
    %v1261 = vpack.c.b16 %v1213, %v1209
    %v1262 = vpack.c.b16 %v1214, %v1210
    %v1263 = vpack.c.b16 %v1219, %v1215
    %v1264 = vpack.c.b16 %v1220, %v1216
    %v1265 = vpack.c.b16 %v1221, %v1217
    %v1266 = vpack.c.b16 %v1222, %v1218
    %v1267 = vpack.c.b16 %v1227, %v1223
    %v1268 = vpack.c.b16 %v1228, %v1224
    %v1269 = vpack.c.b16 %v1229, %v1225
    %v1270 = vpack.c.b16 %v1230, %v1226
    %v1271 = vpack.c.b16 %v1235, %v1231
    %v1272 = vpack.c.b16 %v1236, %v1232
    %v1273 = vpack.c.b16 %v1237, %v1233
    %v1274 = vpack.c.b16 %v1238, %v1234
    %v1275 = vpack.c.b16 %v1243, %v1239
    %v1276 = vpack.c.b16 %v1244, %v1240
    %v1277 = vpack.c.b16 %v1245, %v1241
    %v1278 = vpack.c.b16 %v1246, %v1242
    %1311 = vmatprep.subr.bf16.mxu0 %v1248
    %1312 = vmatpush1.bf16.msra.mxu0 %v1247
    %1313 = vmatprep.subr.bf16.mxu0 %v1252
    %1314 = vmatpush1.bf16.msra.mxu0 %v1251
    %1315 = vmatprep.subr.bf16.mxu0 %v1256
    %1316 = vmatpush1.bf16.msra.mxu0 %v1255
    %1317 = vmatprep.subr.bf16.mxu0 %v1260
    %1318 = vmatpush1.bf16.msra.mxu0 %v1259
    %1319 = vmatprep.subr.bf16.mxu0 %v1264
    %1320 = vmatpush1.bf16.msra.mxu0 %v1263
    %1321 = vmatprep.subr.bf16.mxu0 %v1268
    %1322 = vmatpush1.bf16.msra.mxu0 %v1267
    %1323 = vmatprep.subr.bf16.mxu0 %v1272
    %1324 = vmatpush1.bf16.msra.mxu0 %v1271
    %1325 = vmatprep.subr.bf16.mxu0 %v1276
    %1326 = vmatpush1.bf16.msra.mxu0 %v1275
    %1327 = vmatprep.subr.bf16.mxu0 0
    %1328 = vmatpush1.bf16.msra.mxu0 0
    %1329 = vmatprep.subr.bf16.mxu0 0
    %1330 = vmatpush1.bf16.msra.mxu0 0
    %1331 = vmatprep.subr.bf16.mxu0 0
    %1332 = vmatpush1.bf16.msra.mxu0 0
    %1333 = vmatprep.subr.bf16.mxu0 0
    %1334 = vmatpush1.bf16.msra.mxu0 0
    %1335 = vmatprep.subr.bf16.mxu0 0
    %1336 = vmatpush1.bf16.msra.mxu0 0
    %1337 = vmatprep.subr.bf16.mxu0 0
    %1338 = vmatpush1.bf16.msra.mxu0 0
    %1339 = vmatprep.subr.bf16.mxu0 0
    %1340 = vmatpush1.bf16.msra.mxu0 0
    %1341 = vmatprep.subr.bf16.mxu0 0
    %1342 = vmatpush1.bf16.msra.mxu0 0
    %1343 = vmatprep.mubr.bf16.mxu0 0
    %1344 = vmatmul.mubr.bf16.gmra.mrb[0].mxu0 %v1095
    %v1345 = vpop.f32.mrb[0].mxu0
    %v1346 = vadd.f32 %v1134, %v1345
    %v1347 = vpop.f32.mrb[0].mxu0
    %v1348 = vadd.f32 %v1138, %v1347
    %v1349 = vpop.f32.mrb[0].mxu0
    %v1350 = vadd.f32 %v1134, %v1349
    %v1351 = vpop.f32.mrb[0].mxu0
    %v1352 = vadd.f32 %v1138, %v1351
    %1353 = vmatprep.mubr.bf16.mxu0 0
    %1354 = vmatmul.mubr.bf16.gmra.mrb[0].mxu0 %v1096
    %v1355 = vpop.f32.mrb[0].mxu0
    %v1356 = vadd.f32 %v1134, %v1355
    %v1357 = vpop.f32.mrb[0].mxu0
    %v1358 = vadd.f32 %v1138, %v1357
    %v1359 = vpop.f32.mrb[0].mxu0
    %v1360 = vadd.f32 %v1134, %v1359
    %v1361 = vpop.f32.mrb[0].mxu0
    %v1362 = vadd.f32 %v1138, %v1361
    %1363 = vdwg.mxu0
    %1364 = vmatprep.subr.bf16.mxu0 %v1250
    %1365 = vmatpush1.bf16.msra.mxu0 %v1249
    %1366 = vmatprep.subr.bf16.mxu0 %v1254
    %1367 = vmatpush1.bf16.msra.mxu0 %v1253
    %1368 = vmatprep.subr.bf16.mxu0 %v1258
    %1369 = vmatpush1.bf16.msra.mxu0 %v1257
    %1370 = vmatprep.subr.bf16.mxu0 %v1262
    %1371 = vmatpush1.bf16.msra.mxu0 %v1261
    %1372 = vmatprep.subr.bf16.mxu0 %v1266
    %1373 = vmatpush1.bf16.msra.mxu0 %v1265
    %1374 = vmatprep.subr.bf16.mxu0 %v1270
    %1375 = vmatpush1.bf16.msra.mxu0 %v1269
    %1376 = vmatprep.subr.bf16.mxu0 %v1274
    %1377 = vmatpush1.bf16.msra.mxu0 %v1273
    %1378 = vmatprep.subr.bf16.mxu0 %v1278
    %1379 = vmatpush1.bf16.msra.mxu0 %v1277
    %1380 = vmatprep.subr.bf16.mxu0 0
    %1381 = vmatpush1.bf16.msra.mxu0 0
    %1382 = vmatprep.subr.bf16.mxu0 0
    %1383 = vmatpush1.bf16.msra.mxu0 0
    %1384 = vmatprep.subr.bf16.mxu0 0
    %1385 = vmatpush1.bf16.msra.mxu0 0
    %1386 = vmatprep.subr.bf16.mxu0 0
    %1387 = vmatpush1.bf16.msra.mxu0 0
    %1388 = vmatprep.subr.bf16.mxu0 0
    %1389 = vmatpush1.bf16.msra.mxu0 0
    %1390 = vmatprep.subr.bf16.mxu0 0
    %1391 = vmatpush1.bf16.msra.mxu0 0
    %1392 = vmatprep.subr.bf16.mxu0 0
    %1393 = vmatpush1.bf16.msra.mxu0 0
    %1394 = vmatprep.subr.bf16.mxu0 0
    %1395 = vmatpush1.bf16.msra.mxu0 0
    %1396 = vmatprep.mubr.bf16.mxu0 0
    %1397 = vmatmul.mubr.bf16.gmra.mrb[0].mxu0 %v1095
    %v1398 = vpop.f32.mrb[0].mxu0
    %v1399 = vadd.f32 %v1142, %v1398
    %v1400 = vpop.f32.mrb[0].mxu0
    %v1401 = vadd.f32 %v1146, %v1400
    %v1402 = vpop.f32.mrb[0].mxu0
    %v1403 = vadd.f32 %v1142, %v1402
    %v1404 = vpop.f32.mrb[0].mxu0
    %v1405 = vadd.f32 %v1146, %v1404
    %1406 = vmatprep.mubr.bf16.mxu0 0
    %1407 = vmatmul.mubr.bf16.gmra.mrb[0].mxu0 %v1096
    %v1408 = vpop.f32.mrb[0].mxu0
    %v1409 = vadd.f32 %v1142, %v1408
    %v1410 = vpop.f32.mrb[0].mxu0
    %v1411 = vadd.f32 %v1146, %v1410
    %v1412 = vpop.f32.mrb[0].mxu0
    %v1413 = vadd.f32 %v1142, %v1412
    %v1414 = vpop.f32.mrb[0].mxu0
    %v1415 = vadd.f32 %v1146, %v1414
    %1416 = vdwg.mxu0
    %v1417 = vmul.f32 %v1346, %v1346
    %v1418 = vmul.f32 %v1348, %v1348
    %v1419 = vmul.f32 %v1399, %v1399
    %v1420 = vmul.f32 %v1401, %v1401
    %v1421 = vmul.f32 %v1350, %v1350
    %v1422 = vmul.f32 %v1352, %v1352
    %v1423 = vmul.f32 %v1403, %v1403
    %v1424 = vmul.f32 %v1405, %v1405
    %v1425 = vmul.f32 %v1356, %v1356
    %v1426 = vmul.f32 %v1358, %v1358
    %v1427 = vmul.f32 %v1409, %v1409
    %v1428 = vmul.f32 %v1411, %v1411
    %v1429 = vmul.f32 %v1360, %v1360
    %v1430 = vmul.f32 %v1362, %v1362
    %v1431 = vmul.f32 %v1413, %v1413
    %v1432 = vmul.f32 %v1415, %v1415
    %v1433 = vmul.f32 %v1346, %v1417
    %v1434 = vmul.f32 %v1348, %v1418
    %v1435 = vmul.f32 %v1399, %v1419
    %v1436 = vmul.f32 %v1401, %v1420
    %v1437 = vmul.f32 %v1350, %v1421
    %v1438 = vmul.f32 %v1352, %v1422
    %v1439 = vmul.f32 %v1403, %v1423
    %v1440 = vmul.f32 %v1405, %v1424
    %v1441 = vmul.f32 %v1356, %v1425
    %v1442 = vmul.f32 %v1358, %v1426
    %v1443 = vmul.f32 %v1409, %v1427
    %v1444 = vmul.f32 %v1411, %v1428
    %v1445 = vmul.f32 %v1360, %v1429
    %v1446 = vmul.f32 %v1362, %v1430
    %v1447 = vmul.f32 %v1413, %v1431
    %v1448 = vmul.f32 %v1415, %v1432
    %v1449 = vmul.f32 %v1433, 0.044715
    %v1450 = vmul.f32 %v1434, 0.044715
    %v1451 = vmul.f32 %v1435, 0.044715
    %v1452 = vmul.f32 %v1436, 0.044715
    %v1453 = vmul.f32 %v1437, 0.044715
    %v1454 = vmul.f32 %v1438, 0.044715
    %v1455 = vmul.f32 %v1439, 0.044715
    %v1456 = vmul.f32 %v1440, 0.044715
    %v1457 = vmul.f32 %v1441, 0.044715
    %v1458 = vmul.f32 %v1442, 0.044715
    %v1459 = vmul.f32 %v1443, 0.044715
    %v1460 = vmul.f32 %v1444, 0.044715
    %v1461 = vmul.f32 %v1445, 0.044715
    %v1462 = vmul.f32 %v1446, 0.044715
    %v1463 = vmul.f32 %v1447, 0.044715
    %v1464 = vmul.f32 %v1448, 0.044715
    %v1465 = vadd.f32 %v1346, %v1449
    %v1466 = vadd.f32 %v1348, %v1450
    %v1467 = vadd.f32 %v1399, %v1451
    %v1468 = vadd.f32 %v1401, %v1452
    %v1469 = vadd.f32 %v1350, %v1453
    %v1470 = vadd.f32 %v1352, %v1454
    %v1471 = vadd.f32 %v1403, %v1455
    %v1472 = vadd.f32 %v1405, %v1456
    %v1473 = vadd.f32 %v1356, %v1457
    %v1474 = vadd.f32 %v1358, %v1458
    %v1475 = vadd.f32 %v1409, %v1459
    %v1476 = vadd.f32 %v1411, %v1460
    %v1477 = vadd.f32 %v1360, %v1461
    %v1478 = vadd.f32 %v1362, %v1462
    %v1479 = vadd.f32 %v1413, %v1463
    %v1480 = vadd.f32 %v1415, %v1464
    %v1481 = vmul.f32 %v1465, 0.7978846
    %v1482 = vmul.f32 %v1466, 0.7978846
    %v1483 = vmul.f32 %v1467, 0.7978846
    %v1484 = vmul.f32 %v1468, 0.7978846
    %v1485 = vmul.f32 %v1469, 0.7978846
    %v1486 = vmul.f32 %v1470, 0.7978846
    %v1487 = vmul.f32 %v1471, 0.7978846
    %v1488 = vmul.f32 %v1472, 0.7978846
    %v1489 = vmul.f32 %v1473, 0.7978846
    %v1490 = vmul.f32 %v1474, 0.7978846
    %v1491 = vmul.f32 %v1475, 0.7978846
    %v1492 = vmul.f32 %v1476, 0.7978846
    %v1493 = vmul.f32 %v1477, 0.7978846
    %v1494 = vmul.f32 %v1478, 0.7978846
    %v1495 = vmul.f32 %v1479, 0.7978846
    %v1496 = vmul.f32 %v1480, 0.7978846
    %v1497 = vtanh.pop %v1481
    %v1498 = vtanh.pop %v1482
    %v1499 = vtanh.pop %v1483
    %v1500 = vtanh.pop %v1484
    %v1501 = vtanh.pop %v1485
    %v1502 = vtanh.pop %v1486
    %v1503 = vtanh.pop %v1487
    %v1504 = vtanh.pop %v1488
    %v1505 = vtanh.pop %v1489
    %v1506 = vtanh.pop %v1490
    %v1507 = vtanh.pop %v1491
    %v1508 = vtanh.pop %v1492
    %v1509 = vtanh.pop %v1493
    %v1510 = vtanh.pop %v1494
    %v1511 = vtanh.pop %v1495
    %v1512 = vtanh.pop %v1496
    %v1513 = vadd.f32 %v1497, 1.0
    %v1514 = vadd.f32 %v1498, 1.0
    %v1515 = vadd.f32 %v1499, 1.0
    %v1516 = vadd.f32 %v1500, 1.0
    %v1517 = vadd.f32 %v1501, 1.0
    %v1518 = vadd.f32 %v1502, 1.0
    %v1519 = vadd.f32 %v1503, 1.0
    %v1520 = vadd.f32 %v1504, 1.0
    %v1521 = vadd.f32 %v1505, 1.0
    %v1522 = vadd.f32 %v1506, 1.0
    %v1523 = vadd.f32 %v1507, 1.0
    %v1524 = vadd.f32 %v1508, 1.0
    %v1525 = vadd.f32 %v1509, 1.0
    %v1526 = vadd.f32 %v1510, 1.0
    %v1527 = vadd.f32 %v1511, 1.0
    %v1528 = vadd.f32 %v1512, 1.0
    %v1529 = vmul.f32 %v1513, 0.5
    %v1530 = vmul.f32 %v1514, 0.5
    %v1531 = vmul.f32 %v1515, 0.5
    %v1532 = vmul.f32 %v1516, 0.5
    %v1533 = vmul.f32 %v1517, 0.5
    %v1534 = vmul.f32 %v1518, 0.5
    %v1535 = vmul.f32 %v1519, 0.5
    %v1536 = vmul.f32 %v1520, 0.5
    %v1537 = vmul.f32 %v1521, 0.5
    %v1538 = vmul.f32 %v1522, 0.5
    %v1539 = vmul.f32 %v1523, 0.5
    %v1540 = vmul.f32 %v1524, 0.5
    %v1541 = vmul.f32 %v1525, 0.5
    %v1542 = vmul.f32 %v1526, 0.5
    %v1543 = vmul.f32 %v1527, 0.5
    %v1544 = vmul.f32 %v1528, 0.5
    %v1545 = vmul.f32 %v1346, %v1529
    %v1546 = vmul.f32 %v1348, %v1530
    %v1547 = vmul.f32 %v1399, %v1531
    %v1548 = vmul.f32 %v1401, %v1532
    %v1549 = vmul.f32 %v1350, %v1533
    %v1550 = vmul.f32 %v1352, %v1534
    %v1551 = vmul.f32 %v1403, %v1535
    %v1552 = vmul.f32 %v1405, %v1536
    %v1553 = vmul.f32 %v1356, %v1537
    %v1554 = vmul.f32 %v1358, %v1538
    %v1555 = vmul.f32 %v1409, %v1539
    %v1556 = vmul.f32 %v1411, %v1540
    %v1557 = vmul.f32 %v1360, %v1541
    %v1558 = vmul.f32 %v1362, %v1542
    %v1559 = vmul.f32 %v1413, %v1543
    %v1560 = vmul.f32 %v1415, %v1544
    %v1561 = vpack.c.bf16 %v1549, %v1545
    %v1562 = vpack.c.bf16 %v1550, %v1546
    %v1563 = vpack.c.bf16 %v1551, %v1547
    %v1564 = vpack.c.bf16 %v1552, %v1548
    %v1565 = vpack.c.bf16 %v1557, %v1553
    %v1566 = vpack.c.bf16 %v1558, %v1554
    %v1567 = vpack.c.bf16 %v1559, %v1555
    %v1568 = vpack.c.bf16 %v1560, %v1556
    %v1569 = vld [vmem:[#allocation16] sm:$0xf]
    %v1570 = vld [vmem:[#allocation16 + $0x4] sm:$0xf]
    %v1571 = vld [vmem:[#allocation16 + $0x8] sm:$0xf]
    %v1572 = vld [vmem:[#allocation16 + $0xc] sm:$0xf]
    %v1573 = vld [vmem:[#allocation16 + $0x10] sm:$0xf]
    %v1574 = vld [vmem:[#allocation16 + $0x14] sm:$0xf]
    %v1575 = vld [vmem:[#allocation16 + $0x18] sm:$0xf]
    %v1576 = vld [vmem:[#allocation16 + $0x1c] sm:$0xf]
    %v1577 = vld [vmem:[#allocation16 + $0x20] sm:$0xf]
    %v1578 = vld [vmem:[#allocation16 + $0x24] sm:$0xf]
    %v1579 = vld [vmem:[#allocation16 + $0x28] sm:$0xf]
    %v1580 = vld [vmem:[#allocation16 + $0x2c] sm:$0xf]
    %v1581 = vld [vmem:[#allocation16 + $0x30] sm:$0xf]
    %v1582 = vld [vmem:[#allocation16 + $0x34] sm:$0xf]
    %v1583 = vld [vmem:[#allocation16 + $0x38] sm:$0xf]
    %v1584 = vld [vmem:[#allocation16 + $0x3c] sm:$0xf]
    %v1585 = vld [vmem:[#allocation16 + $0x40] sm:$0xf]
    %v1586 = vld [vmem:[#allocation16 + $0x44] sm:$0xf]
    %v1587 = vld [vmem:[#allocation16 + $0x48] sm:$0xf]
    %v1588 = vld [vmem:[#allocation16 + $0x4c] sm:$0xf]
    %v1589 = vld [vmem:[#allocation16 + $0x50] sm:$0xf]
    %v1590 = vld [vmem:[#allocation16 + $0x54] sm:$0xf]
    %v1591 = vld [vmem:[#allocation16 + $0x58] sm:$0xf]
    %v1592 = vld [vmem:[#allocation16 + $0x5c] sm:$0xf]
    %v1593 = vld [vmem:[#allocation16 + $0x60] sm:$0xf]
    %v1594 = vld [vmem:[#allocation16 + $0x64] sm:$0xf]
    %v1595 = vld [vmem:[#allocation16 + $0x68] sm:$0xf]
    %v1596 = vld [vmem:[#allocation16 + $0x6c] sm:$0xf]
    %v1597 = vld [vmem:[#allocation16 + $0x70] sm:$0xf]
    %v1598 = vld [vmem:[#allocation16 + $0x74] sm:$0xf]
    %v1599 = vld [vmem:[#allocation16 + $0x78] sm:$0xf]
    %v1600 = vld [vmem:[#allocation16 + $0x7c] sm:$0xf]
    %v1601 = vld [vmem:[#allocation16 + $0x80] sm:$0xf]
    %v1602 = vld [vmem:[#allocation16 + $0x84] sm:$0xf]
    %v1603 = vld [vmem:[#allocation16 + $0x88] sm:$0xf]
    %v1604 = vld [vmem:[#allocation16 + $0x8c] sm:$0xf]
    %v1605 = vld [vmem:[#allocation16 + $0x90] sm:$0xf]
    %v1606 = vld [vmem:[#allocation16 + $0x94] sm:$0xf]
    %v1607 = vld [vmem:[#allocation16 + $0x98] sm:$0xf]
    %v1608 = vld [vmem:[#allocation16 + $0x9c] sm:$0xf]
    %v1609 = vld [vmem:[#allocation16 + $0xa0] sm:$0xf]
    %v1610 = vld [vmem:[#allocation16 + $0xa4] sm:$0xf]
    %v1611 = vld [vmem:[#allocation16 + $0xa8] sm:$0xf]
    %v1612 = vld [vmem:[#allocation16 + $0xac] sm:$0xf]
    %v1613 = vld [vmem:[#allocation16 + $0xb0] sm:$0xf]
    %v1614 = vld [vmem:[#allocation16 + $0xb4] sm:$0xf]
    %v1615 = vld [vmem:[#allocation16 + $0xb8] sm:$0xf]
    %v1616 = vld [vmem:[#allocation16 + $0xbc] sm:$0xf]
    %v1617 = vld [vmem:[#allocation16 + $0xc0] sm:$0xf]
    %v1618 = vld [vmem:[#allocation16 + $0xc4] sm:$0xf]
    %v1619 = vld [vmem:[#allocation16 + $0xc8] sm:$0xf]
    %v1620 = vld [vmem:[#allocation16 + $0xcc] sm:$0xf]
    %v1621 = vld [vmem:[#allocation16 + $0xd0] sm:$0xf]
    %v1622 = vld [vmem:[#allocation16 + $0xd4] sm:$0xf]
    %v1623 = vld [vmem:[#allocation16 + $0xd8] sm:$0xf]
    %v1624 = vld [vmem:[#allocation16 + $0xdc] sm:$0xf]
    %v1625 = vld [vmem:[#allocation16 + $0xe0] sm:$0xf]
    %v1626 = vld [vmem:[#allocation16 + $0xe4] sm:$0xf]
    %v1627 = vld [vmem:[#allocation16 + $0xe8] sm:$0xf]
    %v1628 = vld [vmem:[#allocation16 + $0xec] sm:$0xf]
    %v1629 = vld [vmem:[#allocation16 + $0xf0] sm:$0xf]
    %v1630 = vld [vmem:[#allocation16 + $0xf4] sm:$0xf]
    %v1631 = vld [vmem:[#allocation16 + $0xf8] sm:$0xf]
    %v1632 = vld [vmem:[#allocation16 + $0xfc] sm:$0xf]
    %v1633 = vld [vmem:[%s13] sm:$0x1]
    %v1635 = vlaneseq
    %v1636 = vshrl.u32 %v1635, 7
    %v1637 = vsub.s32 0, %v1636
    %v1638 = vrot.slane %v1633, %v1637
    %v1704 = vunpack.c.l.b16 %v1569
    %v1705 = vunpack.c.l.b16 %v1570
    %v1706 = vunpack.c.l.b16 %v1571
    %v1707 = vunpack.c.l.b16 %v1572
    %v1708 = vunpack.c.l.b16 %v1573
    %v1709 = vunpack.c.l.b16 %v1574
    %v1710 = vunpack.c.l.b16 %v1575
    %v1711 = vunpack.c.l.b16 %v1576
    %v1712 = vunpack.c.l.b16 %v1577
    %v1713 = vunpack.c.l.b16 %v1578
    %v1714 = vunpack.c.l.b16 %v1579
    %v1715 = vunpack.c.l.b16 %v1580
    %v1716 = vunpack.c.l.b16 %v1581
    %v1717 = vunpack.c.l.b16 %v1582
    %v1718 = vunpack.c.l.b16 %v1583
    %v1719 = vunpack.c.l.b16 %v1584
    %v1720 = vunpack.c.l.b16 %v1585
    %v1721 = vunpack.c.l.b16 %v1586
    %v1722 = vunpack.c.l.b16 %v1587
    %v1723 = vunpack.c.l.b16 %v1588
    %v1724 = vunpack.c.l.b16 %v1589
    %v1725 = vunpack.c.l.b16 %v1590
    %v1726 = vunpack.c.l.b16 %v1591
    %v1727 = vunpack.c.l.b16 %v1592
    %v1728 = vunpack.c.l.b16 %v1593
    %v1729 = vunpack.c.l.b16 %v1594
    %v1730 = vunpack.c.l.b16 %v1595
    %v1731 = vunpack.c.l.b16 %v1596
    %v1732 = vunpack.c.l.b16 %v1597
    %v1733 = vunpack.c.l.b16 %v1598
    %v1734 = vunpack.c.l.b16 %v1599
    %v1735 = vunpack.c.l.b16 %v1600
    %v1736 = vunpack.c.l.b16 %v1601
    %v1737 = vunpack.c.l.b16 %v1602
    %v1738 = vunpack.c.l.b16 %v1603
    %v1739 = vunpack.c.l.b16 %v1604
    %v1740 = vunpack.c.l.b16 %v1605
    %v1741 = vunpack.c.l.b16 %v1606
    %v1742 = vunpack.c.l.b16 %v1607
    %v1743 = vunpack.c.l.b16 %v1608
    %v1744 = vunpack.c.l.b16 %v1609
    %v1745 = vunpack.c.l.b16 %v1610
    %v1746 = vunpack.c.l.b16 %v1611
    %v1747 = vunpack.c.l.b16 %v1612
    %v1748 = vunpack.c.l.b16 %v1613
    %v1749 = vunpack.c.l.b16 %v1614
    %v1750 = vunpack.c.l.b16 %v1615
    %v1751 = vunpack.c.l.b16 %v1616
    %v1752 = vunpack.c.l.b16 %v1617
    %v1753 = vunpack.c.l.b16 %v1618
    %v1754 = vunpack.c.l.b16 %v1619
    %v1755 = vunpack.c.l.b16 %v1620
    %v1756 = vunpack.c.l.b16 %v1621
    %v1757 = vunpack.c.l.b16 %v1622
    %v1758 = vunpack.c.l.b16 %v1623
    %v1759 = vunpack.c.l.b16 %v1624
    %v1760 = vunpack.c.l.b16 %v1625
    %v1761 = vunpack.c.l.b16 %v1626
    %v1762 = vunpack.c.l.b16 %v1627
    %v1763 = vunpack.c.l.b16 %v1628
    %v1764 = vunpack.c.l.b16 %v1629
    %v1765 = vunpack.c.l.b16 %v1630
    %v1766 = vunpack.c.l.b16 %v1631
    %v1767 = vunpack.c.l.b16 %v1632
    %v1768 = vpack.c.b16 %v1705, %v1704
    %v1769 = vpack.c.b16 %v1707, %v1706
    %v1770 = vpack.c.b16 %v1709, %v1708
    %v1771 = vpack.c.b16 %v1711, %v1710
    %v1772 = vpack.c.b16 %v1713, %v1712
    %v1773 = vpack.c.b16 %v1715, %v1714
    %v1774 = vpack.c.b16 %v1717, %v1716
    %v1775 = vpack.c.b16 %v1719, %v1718
    %v1776 = vpack.c.b16 %v1721, %v1720
    %v1777 = vpack.c.b16 %v1723, %v1722
    %v1778 = vpack.c.b16 %v1725, %v1724
    %v1779 = vpack.c.b16 %v1727, %v1726
    %v1780 = vpack.c.b16 %v1729, %v1728
    %v1781 = vpack.c.b16 %v1731, %v1730
    %v1782 = vpack.c.b16 %v1733, %v1732
    %v1783 = vpack.c.b16 %v1735, %v1734
    %v1784 = vpack.c.b16 %v1737, %v1736
    %v1785 = vpack.c.b16 %v1739, %v1738
    %v1786 = vpack.c.b16 %v1741, %v1740
    %v1787 = vpack.c.b16 %v1743, %v1742
    %v1788 = vpack.c.b16 %v1745, %v1744
    %v1789 = vpack.c.b16 %v1747, %v1746
    %v1790 = vpack.c.b16 %v1749, %v1748
    %v1791 = vpack.c.b16 %v1751, %v1750
    %v1792 = vpack.c.b16 %v1753, %v1752
    %v1793 = vpack.c.b16 %v1755, %v1754
    %v1794 = vpack.c.b16 %v1757, %v1756
    %v1795 = vpack.c.b16 %v1759, %v1758
    %v1796 = vpack.c.b16 %v1761, %v1760
    %v1797 = vpack.c.b16 %v1763, %v1762
    %v1798 = vpack.c.b16 %v1765, %v1764
    %v1799 = vpack.c.b16 %v1767, %v1766
    %1832 = vmatprep.subr.bf16.mxu0 0
    %1833 = vmatpush1.bf16.msra.mxu0 %v1768
    %1834 = vmatprep.subr.bf16.mxu0 0
    %1835 = vmatpush1.bf16.msra.mxu0 %v1769
    %1836 = vmatprep.subr.bf16.mxu0 0
    %1837 = vmatpush1.bf16.msra.mxu0 %v1770
    %1838 = vmatprep.subr.bf16.mxu0 0
    %1839 = vmatpush1.bf16.msra.mxu0 %v1771
    %1840 = vmatprep.subr.bf16.mxu0 0
    %1841 = vmatpush1.bf16.msra.mxu0 %v1772
    %1842 = vmatprep.subr.bf16.mxu0 0
    %1843 = vmatpush1.bf16.msra.mxu0 %v1773
    %1844 = vmatprep.subr.bf16.mxu0 0
    %1845 = vmatpush1.bf16.msra.mxu0 %v1774
    %1846 = vmatprep.subr.bf16.mxu0 0
    %1847 = vmatpush1.bf16.msra.mxu0 %v1775
    %1848 = vmatprep.subr.bf16.mxu0 0
    %1849 = vmatpush1.bf16.msra.mxu0 %v1776
    %1850 = vmatprep.subr.bf16.mxu0 0
    %1851 = vmatpush1.bf16.msra.mxu0 %v1777
    %1852 = vmatprep.subr.bf16.mxu0 0
    %1853 = vmatpush1.bf16.msra.mxu0 %v1778
    %1854 = vmatprep.subr.bf16.mxu0 0
    %1855 = vmatpush1.bf16.msra.mxu0 %v1779
    %1856 = vmatprep.subr.bf16.mxu0 0
    %1857 = vmatpush1.bf16.msra.mxu0 %v1780
    %1858 = vmatprep.subr.bf16.mxu0 0
    %1859 = vmatpush1.bf16.msra.mxu0 %v1781
    %1860 = vmatprep.subr.bf16.mxu0 0
    %1861 = vmatpush1.bf16.msra.mxu0 %v1782
    %1862 = vmatprep.subr.bf16.mxu0 0
    %1863 = vmatpush1.bf16.msra.mxu0 %v1783
    %1864 = vmatprep.mubr.bf16.mxu0 %v1562
    %1865 = vmatmul.mubr.bf16.gmra.mrb[0].mxu0 %v1561
    %v1866 = vpop.f32.mrb[0].mxu0
    %v1867 = vadd.f32 %v1638, %v1866
    %v1868 = vpop.f32.mrb[0].mxu0
    %v1869 = vpop.f32.mrb[0].mxu0
    %v1870 = vadd.f32 %v1638, %v1869
    %v1871 = vpop.f32.mrb[0].mxu0
    %1872 = vmatprep.mubr.bf16.mxu0 %v1566
    %1873 = vmatmul.mubr.bf16.gmra.mrb[0].mxu0 %v1565
    %v1874 = vpop.f32.mrb[0].mxu0
    %v1875 = vadd.f32 %v1638, %v1874
    %v1876 = vpop.f32.mrb[0].mxu0
    %v1877 = vpop.f32.mrb[0].mxu0
    %v1878 = vadd.f32 %v1638, %v1877
    %v1879 = vpop.f32.mrb[0].mxu0
    %1880 = vdwg.mxu0
    %1881 = vmatprep.subr.bf16.mxu0 0
    %1882 = vmatpush1.bf16.msra.mxu0 %v1784
    %1883 = vmatprep.subr.bf16.mxu0 0
    %1884 = vmatpush1.bf16.msra.mxu0 %v1785
    %1885 = vmatprep.subr.bf16.mxu0 0
    %1886 = vmatpush1.bf16.msra.mxu0 %v1786
    %1887 = vmatprep.subr.bf16.mxu0 0
    %1888 = vmatpush1.bf16.msra.mxu0 %v1787
    %1889 = vmatprep.subr.bf16.mxu0 0
    %1890 = vmatpush1.bf16.msra.mxu0 %v1788
    %1891 = vmatprep.subr.bf16.mxu0 0
    %1892 = vmatpush1.bf16.msra.mxu0 %v1789
    %1893 = vmatprep.subr.bf16.mxu0 0
    %1894 = vmatpush1.bf16.msra.mxu0 %v1790
    %1895 = vmatprep.subr.bf16.mxu0 0
    %1896 = vmatpush1.bf16.msra.mxu0 %v1791
    %1897 = vmatprep.subr.bf16.mxu0 0
    %1898 = vmatpush1.bf16.msra.mxu0 %v1792
    %1899 = vmatprep.subr.bf16.mxu0 0
    %1900 = vmatpush1.bf16.msra.mxu0 %v1793
    %1901 = vmatprep.subr.bf16.mxu0 0
    %1902 = vmatpush1.bf16.msra.mxu0 %v1794
    %1903 = vmatprep.subr.bf16.mxu0 0
    %1904 = vmatpush1.bf16.msra.mxu0 %v1795
    %1905 = vmatprep.subr.bf16.mxu0 0
    %1906 = vmatpush1.bf16.msra.mxu0 %v1796
    %1907 = vmatprep.subr.bf16.mxu0 0
    %1908 = vmatpush1.bf16.msra.mxu0 %v1797
    %1909 = vmatprep.subr.bf16.mxu0 0
    %1910 = vmatpush1.bf16.msra.mxu0 %v1798
    %1911 = vmatprep.subr.bf16.mxu0 0
    %1912 = vmatpush1.bf16.msra.mxu0 %v1799
    %1913 = vmatprep.mubr.bf16.mxu0 %v1564
    %1914 = vmatmul.mubr.bf16.gmra.mrb[0].mxu0 %v1563
    %v1915 = vpop.f32.mrb[0].mxu0
    %v1916 = vadd.f32 %v1867, %v1915
    %v1917 = vpop.f32.mrb[0].mxu0
    %v1918 = vpop.f32.mrb[0].mxu0
    %v1919 = vadd.f32 %v1870, %v1918
    %v1920 = vpop.f32.mrb[0].mxu0
    %1921 = vmatprep.mubr.bf16.mxu0 %v1568
    %1922 = vmatmul.mubr.bf16.gmra.mrb[0].mxu0 %v1567
    %v1923 = vpop.f32.mrb[0].mxu0
    %v1924 = vadd.f32 %v1875, %v1923
    %v1925 = vpop.f32.mrb[0].mxu0
    %v1926 = vpop.f32.mrb[0].mxu0
    %v1927 = vadd.f32 %v1878, %v1926
    %v1928 = vpop.f32.mrb[0].mxu0
    %1929 = vdwg.mxu0
    %v1930 = vadd.f32 %v1916, %v981
    %v1931 = vadd.f32 %v1919, %v982
    %v1932 = vadd.f32 %v1924, %v983
    %v1933 = vadd.f32 %v1927, %v984
    %1934 = vst [vmem:[#allocation17] sm:$0xff] %v1930
    %1935 = vst [vmem:[#allocation17 + $0x8] sm:$0xff] %v1931
    %1936 = vst [vmem:[#allocation17 + $0x10] sm:$0xff] %v1932
    %1937 = vst [vmem:[#allocation17 + $0x18] sm:$0xff] %v1933
    // Predicated region
    $region94: #{encoder_forward.1} parent=1 // pred_check
      _
    $region95: #{encoder_forward.1} parent=1 // pred_check_branch
      %1939 = sbr.rel (0) target = $region97
    $region96: #{encoder_forward.1} parent=1 // pred_region
      %s1941 = ssub.s32 512, 512
      %1942 = vsyncadd [#allocation4], %s1941
      %s1943 = sshll.u32 [#allocation17], 4
      %s1944 = int_to_ptr.vmem [resolvable:$true] %s1943
      %1949 = dma.vmem_to_hbm [thread:$0]  %s1944, 512, %s14, [#allocation4], 128, 128, 8
    $region97: #{encoder_forward.1} parent=1 // pred_fallthru
      _
    // Predicated region
    $region98: #{encoder_forward.1} parent=1 // pred_check
      _
    $region99: #{encoder_forward.1} parent=1 // pred_check_branch
      %1951 = sbr.rel (0) target = $region101
    $region100: #{encoder_forward.1} parent=1 // pred_region
      %1952 = dma.done [#allocation4], 512
    $region101: #{encoder_forward.1} parent=1 // pred_fallthru
      _
    %1953 = vsyncpa [#allocation3], 1
    %1954 = vsyncpa [#allocation6], 1
    %1955 = vsyncpa [#allocation9], 1
    %1956 = vsyncpa [#allocation12], 1
    %1957 = vsyncpa [#allocation15], 1
    %1958 = vsyncpa [#allocation4], 1

</llo_original>
